<compile_context>
chip_gen: v7x
topology: tpu7x:2x2x1
jax: 0.10.0
libtpu: 0.0.40
codegen_flags: <defaults>
</compile_context>

<pallas_src>
import functools

import jax
import jax.numpy as jnp
from jax.experimental import pallas as pl
from jax.experimental.pallas import tpu as pltpu


def _attention_mil_kernel(feats_ref, wvu_ref, bvu_ref, ww_ref, bw_ref,
                          emb_ref, logits_ref, m_ref, l_ref,
                          *, n_instances, needs_mask):
    i = pl.program_id(0)
    tn = feats_ref.shape[0]
    d = wvu_ref.shape[1] // 2

    @pl.when(i == 0)
    def _init():
        m_ref[...] = jnp.full_like(m_ref, -jnp.inf)
        l_ref[...] = jnp.zeros_like(l_ref)
        emb_ref[...] = jnp.zeros_like(emb_ref)

    feats = feats_ref[...]                                        # (TN, L)

    # Single fused gating matmul: (TN, L) x (L, 2D) -> (TN, 2D) fills the full
    # 256-wide MXU output on v6e/v7x. Accumulate in f32, add f32 biases.
    vu = jnp.dot(feats, wvu_ref[...],
                 preferred_element_type=jnp.float32) + bvu_ref[...]
    a_v = jnp.tanh(vu[:, :d])                                     # (TN, D)
    # sigmoid(x) == 0.5*(tanh(0.5*x)+1): keeps the transcendental on the EUP
    # slot instead of an exp + VALU reciprocal chain.
    a_u = 0.5 * (jnp.tanh(0.5 * vu[:, d:]) + 1.0)                 # (TN, D)
    gated = a_v * a_u                                             # (TN, D) f32

    # Lane-dense logits: (K,D) x (TN,D)^T -> (K, TN). NT dot avoids any
    # explicit transpose and keeps the softmax math on full 128-lane vregs.
    logits_t = jax.lax.dot_general(
        ww_ref[...], gated.astype(ww_ref.dtype), (((1,), (1,)), ((), ())),
        preferred_element_type=jnp.float32) + bw_ref[...]          # (K, TN)
    logits_ref[...] = logits_t

    if needs_mask:
        # Zero-padded instance rows must not contribute to the softmax.
        row_ids = i * tn + jax.lax.broadcasted_iota(
            jnp.int32, logits_t.shape, 1)
        logits_t = jnp.where(row_ids < n_instances, logits_t, -jnp.inf)

    # Online softmax over the instance axis (lane axis of logits_t).
    m_old = m_ref[...]                                            # (K, 1)
    m_new = jnp.maximum(m_old, jnp.max(logits_t, axis=-1, keepdims=True))
    alpha = jnp.exp(m_old - m_new)                                # (K, 1)
    p_t = jnp.exp(logits_t - m_new)                               # (K, TN)
    l_ref[...] = alpha * l_ref[...] + jnp.sum(p_t, axis=-1, keepdims=True)
    m_ref[...] = m_new

    # Embedding accumulator (K, L): rescale then (K,TN) x (TN,L) on the MXU.
    emb_ref[...] = emb_ref[...] * alpha + jnp.dot(
        p_t.astype(feats.dtype), feats, preferred_element_type=jnp.float32)

    @pl.when(i == pl.num_programs(0) - 1)
    def _finalize():
        # One-time (K,1) exact divide keeps the 1e-4 tolerance of the f32 path.
        emb_ref[...] = emb_ref[...] * pl.reciprocal(l_ref[...], approx=False)


def attention_mil_forward(feats, params, *, tile_n=512, precision="fp32"):
    """feats: (N, L) float32. Returns (embedding, w_logits) like the torch module.

    params = (wv(L,D), bv(1,D), wu(L,D), bu(1,D), ww(K,D), bw(K,1)).
    precision: "fp32" (exact, matches torch within 1e-4) or "bf16" (MXU fast
    path on v6e/v7x, ~1e-2 relative error on the L=512 contraction).
    """
    N, L = feats.shape
    wv, bv, wu, bu, ww, bw = params
    D = wv.shape[1]
    K = ww.shape[0]

    # Fuse the two gating projections into one matmul operand.
    wvu = jnp.concatenate([wv, wu], axis=1)          # (L, 2D)
    bvu = jnp.concatenate([bv, bu], axis=1)          # (1, 2D), stays f32

    if N <= tile_n:
        n_pad = pl.cdiv(N, 128) * 128                # lane-dense single tile
        tn = n_pad
    else:
        assert tile_n % 128 == 0, "tile_n must be a multiple of 128 when tiling"
        tn = tile_n
        n_pad = pl.cdiv(N, tn) * tn

    feats_p = feats if n_pad == N else jnp.pad(feats, ((0, n_pad - N), (0, 0)))

    if precision == "bf16":
        feats_p = feats_p.astype(jnp.bfloat16)
        wvu = wvu.astype(jnp.bfloat16)
        ww_c = ww.astype(jnp.bfloat16)
    else:
        ww_c = ww

    grid = (n_pad // tn,)
    kernel = functools.partial(
        _attention_mil_kernel, n_instances=N, needs_mask=(n_pad != N))

    emb, logits_t = pl.pallas_call(
        kernel,
        out_shape=(
            jax.ShapeDtypeStruct((K, L), jnp.float32),      # embedding (lane-dense)
            jax.ShapeDtypeStruct((K, n_pad), jnp.float32),  # logits, N on lanes
        ),
        grid=grid,
        in_specs=[
            pl.BlockSpec((tn, L), lambda i: (i, 0)),        # feats tile, pipelined
            pl.BlockSpec((L, 2 * D), lambda i: (0, 0)),     # fused gating weight
            pl.BlockSpec((1, 2 * D), lambda i: (0, 0)),     # fused gating bias
            pl.BlockSpec((K, D), lambda i: (0, 0)),
            pl.BlockSpec((K, 1), lambda i: (0, 0)),
        ],
        out_specs=(
            pl.BlockSpec((K, L), lambda i: (0, 0)),         # resident accumulator
            pl.BlockSpec((K, tn), lambda i: (0, i)),
        ),
        scratch_shapes=[
            pltpu.VMEM((K, 1), jnp.float32),                # running max m
            pltpu.VMEM((K, 1), jnp.float32),                # running denom l
        ],
        compiler_params=pltpu.CompilerParams(
            dimension_semantics=("arbitrary",)),            # N is a reduction axis
    )(feats_p, wvu, bvu, ww_c, bw)

    w_logits = logits_t[:, :N].T                 # (N, K), matching the module
    embedding = jnp.squeeze(emb.T)               # (L,) when K == 1
    return embedding, w_logits


def init_params(key, L, D, K):
    k1, k2, k3, k4, k5, k6 = jax.random.split(key, 6)
    scale_l = 1.0 / jnp.sqrt(L)
    scale_d = 1.0 / jnp.sqrt(D)
    wv = jax.random.uniform(k1, (L, D), jnp.float32, -scale_l, scale_l)
    bv = jax.random.uniform(k2, (1, D), jnp.float32, -scale_l, scale_l)
    wu = jax.random.uniform(k3, (L, D), jnp.float32, -scale_l, scale_l)
    bu = jax.random.uniform(k4, (1, D), jnp.float32, -scale_l, scale_l)
    ww = jax.random.uniform(k5, (K, D), jnp.float32, -scale_d, scale_d)
    bw = jax.random.uniform(k6, (K, 1), jnp.float32, -scale_d, scale_d)
    return wv, bv, wu, bu, ww, bw


def reference_forward(feats, params):
    wv, bv, wu, bu, ww, bw = params
    a_v = jnp.tanh(feats @ wv + bv)
    a_u = jax.nn.sigmoid(feats @ wu + bu)
    w_logits = (a_v * a_u) @ ww.T + bw.T
    p = jax.nn.softmax(w_logits, axis=0)
    embedding = jnp.squeeze(feats.T @ p)
    return embedding, w_logits


if __name__ == "__main__":
    # Module defaults L=512, D=128, K=1; N=600 instances exercises 2 pipelined
    # tiles of 512 rows, including a partially masked (padded) last tile.
    N, L, D, K = 600, 512, 128, 1

    key = jax.random.PRNGKey(0)
    k_feats, k_params = jax.random.split(key)
    feats = jax.random.normal(k_feats, (N, L), dtype=jnp.float32)
    params = init_params(k_params, L, D, K)

    # Exact f32 path (default): matches the torch module within 1e-4.
    embedding, w_logits = attention_mil_forward(feats, params)
    embedding = jax.block_until_ready(embedding)
    w_logits = jax.block_until_ready(w_logits)

    ref_emb, ref_logits = reference_forward(feats, params)
    assert embedding.shape == (L,)
    assert w_logits.shape == (N, K)
    assert jnp.allclose(embedding, ref_emb, atol=1e-4, rtol=1e-4)
    assert jnp.allclose(w_logits, ref_logits, atol=1e-4, rtol=1e-4)

    # bf16 fast path (v6e/v7x MXU rate); relaxed tolerance per review note.
    emb_bf16, logits_bf16 = attention_mil_forward(feats, params, precision="bf16")
    emb_bf16 = jax.block_until_ready(emb_bf16)
    logits_bf16 = jax.block_until_ready(logits_bf16)
    assert jnp.allclose(emb_bf16, ref_emb, atol=5e-2, rtol=5e-2)
    assert jnp.allclose(logits_bf16, ref_logits, atol=5e-2, rtol=5e-2)

    print("KERNEL_OK")
</pallas_src>

<mosaic_0001>
module attributes {stable_mosaic.version = 11 : i64} {
  func.func @_attention_mil_kernel(%arg0: i32, %arg1: memref<512x512xf32, #tpu.memory_space<vmem>>, %arg2: memref<512x256xf32, #tpu.memory_space<vmem>>, %arg3: memref<1x256xf32, #tpu.memory_space<vmem>>, %arg4: memref<1x128xf32, #tpu.memory_space<vmem>>, %arg5: memref<1x1xf32, #tpu.memory_space<vmem>>, %arg6: memref<1x512xf32, #tpu.memory_space<vmem>>, %arg7: memref<1x512xf32, #tpu.memory_space<vmem>>, %arg8: memref<1x1xf32, #tpu.memory_space<vmem>>, %arg9: memref<1x1xf32, #tpu.memory_space<vmem>>) attributes {dimension_semantics = [#tpu.dimension_semantics<arbitrary>], iteration_bounds = array<i64: 2>, scalar_prefetch = 0 : i64, scratch_operands = 2 : i64, tpu.core_type = #tpu.core_type<tc>, window_params = [{transform_indices = @transform_0, window_bounds = array<i64: 512, 512>}, {pipeline_mode = #tpu.pipeline_mode<synchronous>, transform_indices = @transform_1, window_bounds = array<i64: 512, 256>}, {pipeline_mode = #tpu.pipeline_mode<synchronous>, transform_indices = @transform_2, window_bounds = array<i64: 1, 256>}, {pipeline_mode = #tpu.pipeline_mode<synchronous>, transform_indices = @transform_3, window_bounds = array<i64: 1, 128>}, {pipeline_mode = #tpu.pipeline_mode<synchronous>, transform_indices = @transform_4, window_bounds = array<i64: 1, 1>}, {pipeline_mode = #tpu.pipeline_mode<synchronous>, transform_indices = @transform_5, window_bounds = array<i64: 1, 512>}, {transform_indices = @transform_6, window_bounds = array<i64: 1, 512>}]} {
    %c0_i32 = arith.constant 0 : i32
    %0 = arith.cmpi eq, %arg0, %c0_i32 : i32
    %1 = arith.extui %0 : i1 to i32
    %c0_i32_0 = arith.constant 0 : i32
    %2 = arith.cmpi ne, %1, %c0_i32_0 : i32
    scf.if %2 {
      %cst_33 = arith.constant 0xFF800000 : f32
      %59 = vector.broadcast %cst_33 : f32 to vector<1x1xf32>
      %c0_34 = arith.constant 0 : index
      %c0_35 = arith.constant 0 : index
      %60 = vector.load %arg8[%c0_34, %c0_35] : memref<1x1xf32, #tpu.memory_space<vmem>>, vector<1x1xf32>
      tpu.vector_store %arg8[%c0_34, %c0_35], %59 {strides = array<i32>} : memref<1x1xf32, #tpu.memory_space<vmem>>, vector<1x1xf32>,
      %cst_36 = arith.constant 0.000000e+00 : f32
      %61 = vector.broadcast %cst_36 : f32 to vector<1x1xf32>
      %c0_37 = arith.constant 0 : index
      %c0_38 = arith.constant 0 : index
      %62 = vector.load %arg9[%c0_37, %c0_38] : memref<1x1xf32, #tpu.memory_space<vmem>>, vector<1x1xf32>
      tpu.vector_store %arg9[%c0_37, %c0_38], %61 {strides = array<i32>} : memref<1x1xf32, #tpu.memory_space<vmem>>, vector<1x1xf32>,
      %cst_39 = arith.constant 0.000000e+00 : f32
      %63 = vector.broadcast %cst_39 : f32 to vector<1x512xf32>
      %c0_40 = arith.constant 0 : index
      %c0_41 = arith.constant 0 : index
      %64 = vector.load %arg6[%c0_40, %c0_41] : memref<1x512xf32, #tpu.memory_space<vmem>>, vector<1x512xf32>
      tpu.vector_store %arg6[%c0_40, %c0_41], %63 {strides = array<i32>} : memref<1x512xf32, #tpu.memory_space<vmem>>, vector<1x512xf32>,
    } else {
    }
    %c0 = arith.constant 0 : index
    %c0_1 = arith.constant 0 : index
    %3 = vector.load %arg1[%c0, %c0_1] : memref<512x512xf32, #tpu.memory_space<vmem>>, vector<512x512xf32>
    %c0_2 = arith.constant 0 : index
    %c0_3 = arith.constant 0 : index
    %4 = vector.load %arg2[%c0_2, %c0_3] : memref<512x256xf32, #tpu.memory_space<vmem>>, vector<512x256xf32>
    %cst = arith.constant dense<0.000000e+00> : vector<512x256xf32>
    %5 = tpu.matmul %3, %4, %cst {dimension_numbers = #tpu.dot_dimension_numbers<[1], [0], [0], [1], [0, 0, 1, 1], [], []>} : vector<512x512xf32>, vector<512x256xf32>, vector<512x256xf32> -> vector<512x256xf32>
    %c0_4 = arith.constant 0 : index
    %c0_5 = arith.constant 0 : index
    %6 = vector.load %arg3[%c0_4, %c0_5] : memref<1x256xf32, #tpu.memory_space<vmem>>, vector<1x256xf32>
    %7 = vector.broadcast %6 : vector<1x256xf32> to vector<512x256xf32>
    %8 = arith.addf %5, %7 : vector<512x256xf32>
    %9 = vector.extract_strided_slice %8 {offsets = [0, 0], sizes = [512, 128], strides = [1, 1]} : vector<512x256xf32> to vector<512x128xf32>
    %10 = math.tanh %9 : vector<512x128xf32>
    %11 = vector.extract_strided_slice %8 {offsets = [0, 128], sizes = [512, 128], strides = [1, 1]} : vector<512x256xf32> to vector<512x128xf32>
    %cst_6 = arith.constant 5.000000e-01 : f32
    %12 = vector.broadcast %cst_6 : f32 to vector<512x128xf32>
    %13 = arith.mulf %12, %11 : vector<512x128xf32>
    %14 = math.tanh %13 : vector<512x128xf32>
    %cst_7 = arith.constant 1.000000e+00 : f32
    %15 = vector.broadcast %cst_7 : f32 to vector<512x128xf32>
    %16 = arith.addf %14, %15 : vector<512x128xf32>
    %cst_8 = arith.constant 5.000000e-01 : f32
    %17 = vector.broadcast %cst_8 : f32 to vector<512x128xf32>
    %18 = arith.mulf %17, %16 : vector<512x128xf32>
    %19 = arith.mulf %10, %18 : vector<512x128xf32>
    %c0_9 = arith.constant 0 : index
    %c0_10 = arith.constant 0 : index
    %20 = vector.load %arg4[%c0_9, %c0_10] : memref<1x128xf32, #tpu.memory_space<vmem>>, vector<1x128xf32>
    %cst_11 = arith.constant dense<0.000000e+00> : vector<1x512xf32>
    %21 = tpu.matmul %20, %19, %cst_11 {dimension_numbers = #tpu.dot_dimension_numbers<[1], [1], [0], [0], [0, 0, 1, 0], [], []>} : vector<1x128xf32>, vector<512x128xf32>, vector<1x512xf32> -> vector<1x512xf32>
    %c0_12 = arith.constant 0 : index
    %c0_13 = arith.constant 0 : index
    %22 = vector.load %arg5[%c0_12, %c0_13] : memref<1x1xf32, #tpu.memory_space<vmem>>, vector<1x1xf32>
    %23 = vector.broadcast %22 : vector<1x1xf32> to vector<1x512xf32>
    %24 = arith.addf %21, %23 : vector<1x512xf32>
    %c0_14 = arith.constant 0 : index
    %c0_15 = arith.constant 0 : index
    %25 = vector.load %arg7[%c0_14, %c0_15] : memref<1x512xf32, #tpu.memory_space<vmem>>, vector<1x512xf32>
    tpu.vector_store %arg7[%c0_14, %c0_15], %24 {strides = array<i32>} : memref<1x512xf32, #tpu.memory_space<vmem>>, vector<1x512xf32>,
    %c512_i32 = arith.constant 512 : i32
    %26 = arith.muli %arg0, %c512_i32 : i32
    %27 = tpu.iota {dimensions = array<i32: 1>} : vector<1x512xi32>
    %28 = vector.broadcast %26 : i32 to vector<1x512xi32>
    %29 = arith.addi %28, %27 : vector<1x512xi32>
    %c600_i32 = arith.constant 600 : i32
    %30 = vector.broadcast %c600_i32 : i32 to vector<1x512xi32>
    %31 = arith.cmpi slt, %29, %30 : vector<1x512xi32>
    %cst_16 = arith.constant 0xFF800000 : f32
    %32 = vector.broadcast %cst_16 : f32 to vector<1x512xf32>
    %33 = arith.select %31, %24, %32 : vector<1x512xi1>, vector<1x512xf32>
    %c0_17 = arith.constant 0 : index
    %c0_18 = arith.constant 0 : index
    %34 = vector.load %arg8[%c0_17, %c0_18] : memref<1x1xf32, #tpu.memory_space<vmem>>, vector<1x1xf32>
    %cst_19 = arith.constant dense<0xFF800000> : vector<1xf32>
    %35 = vector.multi_reduction <maximumf>, %33, %cst_19 [1] : vector<1x512xf32> to vector<1xf32>
    %36 = vector.shape_cast %35 : vector<1xf32> to vector<1x1xf32>
    %37 = arith.maximumf %34, %36 : vector<1x1xf32>
    %38 = arith.subf %34, %37 : vector<1x1xf32>
    %39 = math.exp %38 : vector<1x1xf32>
    %40 = vector.broadcast %37 : vector<1x1xf32> to vector<1x512xf32>
    %41 = arith.subf %33, %40 : vector<1x512xf32>
    %42 = math.exp %41 : vector<1x512xf32>
    %c0_20 = arith.constant 0 : index
    %c0_21 = arith.constant 0 : index
    %43 = vector.load %arg9[%c0_20, %c0_21] : memref<1x1xf32, #tpu.memory_space<vmem>>, vector<1x1xf32>
    %44 = arith.mulf %39, %43 : vector<1x1xf32>
    %cst_22 = arith.constant dense<0.000000e+00> : vector<1xf32>
    %45 = vector.multi_reduction <add>, %42, %cst_22 [1] : vector<1x512xf32> to vector<1xf32>
    %46 = vector.shape_cast %45 : vector<1xf32> to vector<1x1xf32>
    %47 = arith.addf %44, %46 : vector<1x1xf32>
    %c0_23 = arith.constant 0 : index
    %c0_24 = arith.constant 0 : index
    %48 = vector.load %arg9[%c0_23, %c0_24] : memref<1x1xf32, #tpu.memory_space<vmem>>, vector<1x1xf32>
    tpu.vector_store %arg9[%c0_23, %c0_24], %47 {strides = array<i32>} : memref<1x1xf32, #tpu.memory_space<vmem>>, vector<1x1xf32>,
    %c0_25 = arith.constant 0 : index
    %c0_26 = arith.constant 0 : index
    %49 = vector.load %arg8[%c0_25, %c0_26] : memref<1x1xf32, #tpu.memory_space<vmem>>, vector<1x1xf32>
    tpu.vector_store %arg8[%c0_25, %c0_26], %37 {strides = array<i32>} : memref<1x1xf32, #tpu.memory_space<vmem>>, vector<1x1xf32>,
    %c0_27 = arith.constant 0 : index
    %c0_28 = arith.constant 0 : index
    %50 = vector.load %arg6[%c0_27, %c0_28] : memref<1x512xf32, #tpu.memory_space<vmem>>, vector<1x512xf32>
    %51 = vector.broadcast %39 : vector<1x1xf32> to vector<1x512xf32>
    %52 = arith.mulf %50, %51 : vector<1x512xf32>
    %cst_29 = arith.constant dense<0.000000e+00> : vector<1x512xf32>
    %53 = tpu.matmul %42, %3, %cst_29 {dimension_numbers = #tpu.dot_dimension_numbers<[1], [0], [0], [1], [0, 0, 1, 1], [], []>} : vector<1x512xf32>, vector<512x512xf32>, vector<1x512xf32> -> vector<1x512xf32>
    %54 = arith.addf %52, %53 : vector<1x512xf32>
    %c0_30 = arith.constant 0 : index
    %c0_31 = arith.constant 0 : index
    %55 = vector.load %arg6[%c0_30, %c0_31] : memref<1x512xf32, #tpu.memory_space<vmem>>, vector<1x512xf32>
    tpu.vector_store %arg6[%c0_30, %c0_31], %54 {strides = array<i32>} : memref<1x512xf32, #tpu.memory_space<vmem>>, vector<1x512xf32>,
    %c1_i32 = arith.constant 1 : i32
    %56 = arith.cmpi eq, %arg0, %c1_i32 : i32
    %57 = arith.extui %56 : i1 to i32
    %c0_i32_32 = arith.constant 0 : i32
    %58 = arith.cmpi ne, %57, %c0_i32_32 : i32
    scf.if %58 {
      %c0_33 = arith.constant 0 : index
      %c0_34 = arith.constant 0 : index
      %59 = vector.load %arg6[%c0_33, %c0_34] : memref<1x512xf32, #tpu.memory_space<vmem>>, vector<1x512xf32>
      %c0_35 = arith.constant 0 : index
      %c0_36 = arith.constant 0 : index
      %60 = vector.load %arg9[%c0_35, %c0_36] : memref<1x1xf32, #tpu.memory_space<vmem>>, vector<1x1xf32>
      %61 = tpu.reciprocal %60 : vector<1x1xf32> -> vector<1x1xf32>
      %62 = vector.broadcast %61 : vector<1x1xf32> to vector<1x512xf32>
      %63 = arith.mulf %59, %62 : vector<1x512xf32>
      %c0_37 = arith.constant 0 : index
      %c0_38 = arith.constant 0 : index
      %64 = vector.load %arg6[%c0_37, %c0_38] : memref<1x512xf32, #tpu.memory_space<vmem>>, vector<1x512xf32>
      tpu.vector_store %arg6[%c0_37, %c0_38], %63 {strides = array<i32>} : memref<1x512xf32, #tpu.memory_space<vmem>>, vector<1x512xf32>,
    } else {
    }
    return
  }
  func.func @transform_0(%arg0: i32) -> (i32, i32) {
    %c0_i32 = arith.constant 0 : i32
    %c0_i32_0 = arith.constant 0 : i32
    return %arg0, %c0_i32 : i32, i32
  }
  func.func @transform_1(%arg0: i32) -> (i32, i32) {
    %c0_i32 = arith.constant 0 : i32
    %c0_i32_0 = arith.constant 0 : i32
    %c0_i32_1 = arith.constant 0 : i32
    return %c0_i32, %c0_i32_0 : i32, i32
  }
  func.func @transform_2(%arg0: i32) -> (i32, i32) {
    %c0_i32 = arith.constant 0 : i32
    %c0_i32_0 = arith.constant 0 : i32
    %c0_i32_1 = arith.constant 0 : i32
    return %c0_i32, %c0_i32_0 : i32, i32
  }
  func.func @transform_3(%arg0: i32) -> (i32, i32) {
    %c0_i32 = arith.constant 0 : i32
    %c0_i32_0 = arith.constant 0 : i32
    %c0_i32_1 = arith.constant 0 : i32
    return %c0_i32, %c0_i32_0 : i32, i32
  }
  func.func @transform_4(%arg0: i32) -> (i32, i32) {
    %c0_i32 = arith.constant 0 : i32
    %c0_i32_0 = arith.constant 0 : i32
    %c0_i32_1 = arith.constant 0 : i32
    return %c0_i32, %c0_i32_0 : i32, i32
  }
  func.func @transform_5(%arg0: i32) -> (i32, i32) {
    %c0_i32 = arith.constant 0 : i32
    %c0_i32_0 = arith.constant 0 : i32
    %c0_i32_1 = arith.constant 0 : i32
    return %c0_i32, %c0_i32_0 : i32, i32
  }
  func.func @transform_6(%arg0: i32) -> (i32, i32) {
    %c0_i32 = arith.constant 0 : i32
    %c0_i32_0 = arith.constant 0 : i32
    return %c0_i32, %arg0 : i32, i32
  }
}

</mosaic_0001>

<llo_original>
// kernel: tpu_custom_call.1
$region0: #{tpu_custom_call.1}
  #allocation0 [shape = 'u32[]', space=smem, size = 0x4, offset = 0x4, fixed_abs, tag = 'smem constant byte address 0x4 - core index']
  #allocation1 [shape = 'u32[144,128]{1,0:T(1,128)}', space=vmem, size = 0x12000, scoped, tag = 'internal scratch']
  #allocation2 [shape = 'f32[1,1]{1,0:T(1,128)}', space=vmem, size = 0x200, scoped, tag = 'scratch operand']
  #allocation3 [shape = 'f32[1,1]{1,0:T(1,128)}', space=vmem, size = 0x200, scoped, tag = 'scratch operand']
  #allocation4 [shape = 'f32[1,1]{1,0:T(1,128)S(1)}', space=vmem, size = 0x200, scoped, tag = 'scoped memory for tpu_custom_call.1']
  %s0 = inlined_call_operand.hbm [shape: f32[1024,512], index: 0, kind: input, shape index: {}]
  %s1 = inlined_call_operand.hbm [shape: f32[512,256], index: 1, kind: input, shape index: {}]
  %s2 = inlined_call_operand.hbm [shape: f32[1,256], index: 2, kind: input, shape index: {}]
  %s3 = inlined_call_operand.hbm [shape: f32[1,128], index: 3, kind: input, shape index: {}]
  %s4 = inlined_call_operand.<no memory space> [shape: f32[1,1], index: 4, kind: input, shape index: {}]
  %s5 = inlined_call_operand.hbm [shape: f32[1,512], index: 5, kind: output, shape index: {0}]
  %s6 = inlined_call_operand.hbm [shape: f32[1,1024], index: 6, kind: output, shape index: {1}]
  %7 = xla_tuple %s5, %s6
  %s8 = sld [smem:[#allocation0]]
  $region85: #{tpu_custom_call.1} parent=0
    _
  %s10 = ssub.s32 1, %s8
  %s11 = scalar_select 0, %s10, %s8
  %v12 = vstv %s4
  %13 = vst [vmem:[#allocation4] sm:$0x1] %v12
  $region1: #{tpu_custom_call.1} parent=0
    #allocation5 [shape = 'u8[2097152]{0}', space=vmem, size = 0x200000, scoped, tag = 'input window, operand 0']
    #allocation6 [shape = 's32[2]{0}', space=sflag, size = 0x8, scoped, tag = 'scoped memory for tpu_custom_call.1']
    #allocation7 [shape = 's32[2]{0}', space=sflag, size = 0x8, scoped, tag = 'scoped memory for tpu_custom_call.1']
    #allocation8 [shape = 'u8[524288]{0}', space=vmem, size = 0x80000, scoped, tag = 'input window, operand 1, single buffered']
    #allocation9 [shape = 's32[1]{0}', space=sflag, size = 0x4, scoped, tag = 'scoped memory for tpu_custom_call.1']
    #allocation10 [shape = 'u8[1024]{0}', space=vmem, size = 0x400, scoped, tag = 'input window, operand 2, single buffered']
    #allocation11 [shape = 'u8[512]{0}', space=vmem, size = 0x400, scoped, tag = 'input window, operand 3, single buffered']
    #allocation12 [shape = 's32[1]{0}', space=sflag, size = 0x4, scoped, tag = 'scoped memory for tpu_custom_call.1']
    #allocation13 [shape = 'u8[2048]{0}', space=vmem, size = 0x800, scoped, tag = 'output window, operand 0, single buffered']
    #allocation14 [shape = 'u8[4096]{0}', space=vmem, size = 0x1000, scoped, tag = 'output window, operand 1']
    #allocation15 [shape = 's32[2]{0}', space=sflag, size = 0x8, scoped, tag = 'scoped memory for tpu_custom_call.1']
    %14 = vsyncpa [#allocation6], 0
    %s15 = scalar_lea.sflag [#allocation6], 1
    %16 = vsyncpa %s15, 0
    %17 = vsyncpa [#allocation9], 0
    %18 = vsyncpa [#allocation12], 0
    %19 = vsyncpa [#allocation7], 0
    %20 = vsyncpa [#allocation15], 0
    %s21 = scalar_lea.sflag [#allocation15], 1
    %22 = vsyncpa %s21, 0
    loop: start=0, step=1, limit=4
    $region2: #{tpu_custom_call.1} parent=1 // loop_pre_header
      _
    $region3: #{tpu_custom_call.1} parent=1 // loop_header
      %s24 = sphi 0, %s28
      %p25 = scmp.ge.s32.totalorder %s24, 4
      %s34 = sphi 0, %s36
      %s37 = sphi 0, %s34
      %s38 = sphi 0, %s37
      %s54 = sphi 0, %s38
      %s58 = sphi 0, %s58
      %s60 = sphi 0, %s58
      %s61 = sphi 0, %s60
      %s75 = sphi 0, %s61
      %s79 = sphi 0, %s79
      %s81 = sphi 0, %s79
      %s82 = sphi 0, %s81
      %s96 = sphi 0, %s82
      %s100 = sphi 0, %s100
      %s102 = sphi 0, %s100
      %s103 = sphi 0, %s102
      %s117 = sphi 0, %s103
      %s121 = sphi 0, %s121
      %s123 = sphi 0, %s121
      %s124 = sphi 0, %s123
      %s138 = sphi 0, %s124
      %s142 = sphi 0, %s142
      %s144 = sphi 0, %s142
      %s145 = sphi 0, %s144
      %s159 = sphi 0, %s145
      %s165 = sphi 0, %s167
      %s168 = sphi 0, %s165
      %s169 = sphi 0, %s168
      %s185 = sphi 0, %s169
    $region4: #{tpu_custom_call.1} parent=1 // loop_header_branch
      %27 = sbr.rel (%p25) target = $region8
    $region5: #{tpu_custom_call.1} parent=1 // loop_body
      %s29 = ssub.s32 %s24, 1
      %s30 = ssub.s32 %s24, 2
      %s31 = sadd.s32 %s24, 1
      %s32 = ssub.s32 %s24, %s31
      %p33 = scmp.eq.s32.totalorder %s32, 0
      %s35 = sadd.s32 %s34, 1
      %s36 = scalar_select %p33, %s34, %s35
      %p39 = pneg %p33
      %p40 = scmp.eq.s32.totalorder %s24, 1
      %p41 = por %p39, %p40
      %p42 = scmp.ne.s32.totalorder %s34, %s37
      %p43 = scmp.eq.s32.totalorder %s24, 0
      %p44 = por %p42, %p43
      %p45 = scmp.ne.s32.totalorder %s34, %s37
      %p46 = scmp.eq.s32.totalorder %s29, 1
      %p47 = por %p45, %p46
      %p48 = scmp.ne.s32.totalorder %s37, %s38
      %p49 = scmp.eq.s32.totalorder %s29, 0
      %p50 = por %p48, %p49
      %p51 = scmp.ne.s32.totalorder %s37, %s38
      %p52 = scmp.eq.s32.totalorder %s30, 1
      %p53 = por %p51, %p52
      %p55 = scmp.ne.s32.totalorder %s38, %s54
      %p56 = scmp.eq.s32.totalorder %s30, 0
      %p57 = por %p55, %p56
      %s59 = sadd.s32 %s58, 1
      %p62 = scmp.eq.s32.totalorder %s24, 1
      %p63 = scmp.ne.s32.totalorder %s58, %s60
      %p64 = scmp.eq.s32.totalorder %s24, 0
      %p65 = por %p63, %p64
      %p66 = scmp.ne.s32.totalorder %s58, %s60
      %p67 = scmp.eq.s32.totalorder %s29, 1
      %p68 = por %p66, %p67
      %p69 = scmp.ne.s32.totalorder %s60, %s61
      %p70 = scmp.eq.s32.totalorder %s29, 0
      %p71 = por %p69, %p70
      %p72 = scmp.ne.s32.totalorder %s60, %s61
      %p73 = scmp.eq.s32.totalorder %s30, 1
      %p74 = por %p72, %p73
      %p76 = scmp.ne.s32.totalorder %s61, %s75
      %p77 = scmp.eq.s32.totalorder %s30, 0
      %p78 = por %p76, %p77
      %s80 = sadd.s32 %s79, 1
      %p83 = scmp.eq.s32.totalorder %s24, 1
      %p84 = scmp.ne.s32.totalorder %s79, %s81
      %p85 = scmp.eq.s32.totalorder %s24, 0
      %p86 = por %p84, %p85
      %p87 = scmp.ne.s32.totalorder %s79, %s81
      %p88 = scmp.eq.s32.totalorder %s29, 1
      %p89 = por %p87, %p88
      %p90 = scmp.ne.s32.totalorder %s81, %s82
      %p91 = scmp.eq.s32.totalorder %s29, 0
      %p92 = por %p90, %p91
      %p93 = scmp.ne.s32.totalorder %s81, %s82
      %p94 = scmp.eq.s32.totalorder %s30, 1
      %p95 = por %p93, %p94
      %p97 = scmp.ne.s32.totalorder %s82, %s96
      %p98 = scmp.eq.s32.totalorder %s30, 0
      %p99 = por %p97, %p98
      %s101 = sadd.s32 %s100, 1
      %p104 = scmp.eq.s32.totalorder %s24, 1
      %p105 = scmp.ne.s32.totalorder %s100, %s102
      %p106 = scmp.eq.s32.totalorder %s24, 0
      %p107 = por %p105, %p106
      %p108 = scmp.ne.s32.totalorder %s100, %s102
      %p109 = scmp.eq.s32.totalorder %s29, 1
      %p110 = por %p108, %p109
      %p111 = scmp.ne.s32.totalorder %s102, %s103
      %p112 = scmp.eq.s32.totalorder %s29, 0
      %p113 = por %p111, %p112
      %p114 = scmp.ne.s32.totalorder %s102, %s103
      %p115 = scmp.eq.s32.totalorder %s30, 1
      %p116 = por %p114, %p115
      %p118 = scmp.ne.s32.totalorder %s103, %s117
      %p119 = scmp.eq.s32.totalorder %s30, 0
      %p120 = por %p118, %p119
      %s122 = sadd.s32 %s121, 1
      %p125 = scmp.eq.s32.totalorder %s24, 1
      %p126 = scmp.ne.s32.totalorder %s121, %s123
      %p127 = scmp.eq.s32.totalorder %s24, 0
      %p128 = por %p126, %p127
      %p129 = scmp.ne.s32.totalorder %s121, %s123
      %p130 = scmp.eq.s32.totalorder %s29, 1
      %p131 = por %p129, %p130
      %p132 = scmp.ne.s32.totalorder %s123, %s124
      %p133 = scmp.eq.s32.totalorder %s29, 0
      %p134 = por %p132, %p133
      %p135 = scmp.ne.s32.totalorder %s123, %s124
      %p136 = scmp.eq.s32.totalorder %s30, 1
      %p137 = por %p135, %p136
      %p139 = scmp.ne.s32.totalorder %s124, %s138
      %p140 = scmp.eq.s32.totalorder %s30, 0
      %p141 = por %p139, %p140
      %s143 = sadd.s32 %s142, 1
      %p146 = scmp.eq.s32.totalorder %s24, 1
      %p147 = scmp.ne.s32.totalorder %s142, %s144
      %p148 = scmp.eq.s32.totalorder %s24, 0
      %p149 = por %p147, %p148
      %p150 = scmp.ne.s32.totalorder %s142, %s144
      %p151 = scmp.eq.s32.totalorder %s29, 1
      %p152 = por %p150, %p151
      %p153 = scmp.ne.s32.totalorder %s144, %s145
      %p154 = scmp.eq.s32.totalorder %s29, 0
      %p155 = por %p153, %p154
      %p156 = scmp.ne.s32.totalorder %s144, %s145
      %p157 = scmp.eq.s32.totalorder %s30, 1
      %p158 = por %p156, %p157
      %p160 = scmp.ne.s32.totalorder %s145, %s159
      %p161 = scmp.eq.s32.totalorder %s30, 0
      %p162 = por %p160, %p161
      %s163 = ssub.s32 %s24, %s31
      %p164 = scmp.eq.s32.totalorder %s163, 0
      %s166 = sadd.s32 %s165, 1
      %s167 = scalar_select %p164, %s165, %s166
      %p170 = pneg %p164
      %p171 = scmp.eq.s32.totalorder %s24, 1
      %p172 = por %p170, %p171
      %p173 = scmp.ne.s32.totalorder %s165, %s168
      %p174 = scmp.eq.s32.totalorder %s24, 0
      %p175 = por %p173, %p174
      %p176 = scmp.ne.s32.totalorder %s165, %s168
      %p177 = scmp.eq.s32.totalorder %s29, 1
      %p178 = por %p176, %p177
      %p179 = scmp.ne.s32.totalorder %s168, %s169
      %p180 = scmp.eq.s32.totalorder %s29, 0
      %p181 = por %p179, %p180
      %p182 = scmp.ne.s32.totalorder %s168, %s169
      %p183 = scmp.eq.s32.totalorder %s30, 1
      %p184 = por %p182, %p183
      %p186 = scmp.ne.s32.totalorder %s169, %s185
      %p187 = scmp.eq.s32.totalorder %s30, 0
      %p188 = por %p186, %p187
      %p189 = scmp.le.s32.totalorder 1, %s24
      %p190 = scmp.lt.s32.totalorder %s24, 3
      %p191 = pnand %p189, %p190
      %p192 = pneg %p191
      // Predicated region
      $region9: #{tpu_custom_call.1} parent=5 // pred_check
        _
      $region10: #{tpu_custom_call.1} parent=5 // pred_check_branch
        %194 = sbr.rel (%p191) target = $region12
      $region11: #{tpu_custom_call.1} parent=5 // pred_region
        %s195 = ssub.s32 %s24, 1
        // Predicated region
        $region13: #{tpu_custom_call.1} parent=11 // pred_check
          %p196 = pneg %p71
        $region14: #{tpu_custom_call.1} parent=11 // pred_check_branch
          %198 = sbr.rel (%p196) target = $region16
        $region15: #{tpu_custom_call.1} parent=11 // pred_region
          %s200 = ssub.s32 16384, 16384
          %201 = vsyncadd [#allocation9], %s200
          %s202 = sshll.u32 [#allocation8], 4
          %s203 = int_to_ptr.vmem [resolvable:$true] %s202
          %208 = dma.hbm_to_vmem [thread:$0]  %s1, 16384, %s203, [#allocation9], 256, 256, 16
        $region16: #{tpu_custom_call.1} parent=11 // pred_fallthru
          _
        // Predicated region
        $region17: #{tpu_custom_call.1} parent=11 // pred_check
          %p209 = pneg %p92
        $region18: #{tpu_custom_call.1} parent=11 // pred_check_branch
          %211 = sbr.rel (%p209) target = $region20
        $region19: #{tpu_custom_call.1} parent=11 // pred_region
          %s213 = ssub.s32 32, 32
          %214 = vsyncadd [#allocation9], %s213
          %s216 = sshll.u32 [#allocation10], 4
          %s217 = int_to_ptr.vmem [resolvable:$true] %s216
          %219 = dma.hbm_to_vmem [thread:$0]  %s2, 32, %s217, [#allocation9]
        $region20: #{tpu_custom_call.1} parent=11 // pred_fallthru
          _
        // Predicated region
        $region21: #{tpu_custom_call.1} parent=11 // pred_check
          %p220 = pneg %p113
        $region22: #{tpu_custom_call.1} parent=11 // pred_check_branch
          %222 = sbr.rel (%p220) target = $region24
        $region23: #{tpu_custom_call.1} parent=11 // pred_region
          %s224 = ssub.s32 16, 16
          %225 = vsyncadd [#allocation12], %s224
          %s227 = sshll.u32 [#allocation11], 4
          %s228 = int_to_ptr.vmem [resolvable:$true] %s227
          %230 = dma.hbm_to_vmem [thread:$0]  %s3, 16, %s228, [#allocation12]
        $region24: #{tpu_custom_call.1} parent=11 // pred_fallthru
          _
        // Predicated region
        $region25: #{tpu_custom_call.1} parent=11 // pred_check
          %p231 = pneg %p134
        $region26: #{tpu_custom_call.1} parent=11 // pred_check_branch
          %233 = sbr.rel (%p231) target = $region28
        $region27: #{tpu_custom_call.1} parent=11 // pred_region
          _
        $region28: #{tpu_custom_call.1} parent=11 // pred_fallthru
          _
      $region12: #{tpu_custom_call.1} parent=5 // pred_fallthru
        _
      %p234 = scmp.lt.s32.totalorder %s24, 2
      // Predicated region
      $region29: #{tpu_custom_call.1} parent=5 // pred_check
        %p235 = pneg %p234
      $region30: #{tpu_custom_call.1} parent=5 // pred_check_branch
        %237 = sbr.rel (%p235) target = $region32
      $region31: #{tpu_custom_call.1} parent=5 // pred_region
        // Predicated region
        $region33: #{tpu_custom_call.1} parent=31 // pred_check
          %p238 = pneg %p44
        $region34: #{tpu_custom_call.1} parent=31 // pred_check_branch
          %240 = sbr.rel (%p238) target = $region36
        $region35: #{tpu_custom_call.1} parent=31 // pred_region
          %s241 = sand.u32 %s34, 1
          %s242 = scalar_lea.sflag [#allocation6], %s241
          %s243 = sand.u32 %s34, 1
          %s244 = smul.addr %s243, 2048
          %s245 = scalar_lea.vmem [#allocation5], %s244
          %s246 = smul.u32 64, %s24
          %s248 = ssub.s32 32768, 32768
          %249 = vsyncadd %s242, %s248
          %s250 = smul.addr %s246, 4
          %s251 = smul.addr %s250, 128
          %s252 = scalar_lea.hbm %s0, %s251
          %s253 = sshll.u32 %s245, 4
          %s254 = int_to_ptr.vmem [resolvable:$true] %s253
          %259 = dma.hbm_to_vmem [thread:$0]  %s252, 32768, %s254, %s242, 512, 512, 32
        $region36: #{tpu_custom_call.1} parent=31 // pred_fallthru
          _
      $region32: #{tpu_custom_call.1} parent=5 // pred_fallthru
        _
      %p260 = scmp.le.s32.totalorder 1, %s24
      %p261 = scmp.lt.s32.totalorder %s24, 3
      %p262 = pnand %p260, %p261
      %p263 = pneg %p262
      // Predicated region
      $region37: #{tpu_custom_call.1} parent=5 // pred_check
        _
      $region38: #{tpu_custom_call.1} parent=5 // pred_check_branch
        %265 = sbr.rel (%p262) target = $region40
      $region39: #{tpu_custom_call.1} parent=5 // pred_region
        %s266 = ssub.s32 %s24, 1
        %s267 = sand.u32 %s37, 1
        %s268 = scalar_lea.sflag [#allocation6], %s267
        %s269 = sand.u32 %s37, 1
        %s270 = smul.addr %s269, 2048
        %s271 = scalar_lea.vmem [#allocation5], %s270
        // Predicated region
        $region41: #{tpu_custom_call.1} parent=39 // pred_check
          %p272 = pneg %p50
        $region42: #{tpu_custom_call.1} parent=39 // pred_check_branch
          %274 = sbr.rel (%p272) target = $region44
        $region43: #{tpu_custom_call.1} parent=39 // pred_region
          %275 = dma.done %s268, 32768
        $region44: #{tpu_custom_call.1} parent=39 // pred_fallthru
          _
        // Predicated region
        $region45: #{tpu_custom_call.1} parent=39 // pred_check
          %p276 = pneg %p71
        $region46: #{tpu_custom_call.1} parent=39 // pred_check_branch
          %278 = sbr.rel (%p276) target = $region48
        $region47: #{tpu_custom_call.1} parent=39 // pred_region
          %279 = dma.done [#allocation9], 16384
        $region48: #{tpu_custom_call.1} parent=39 // pred_fallthru
          _
        // Predicated region
        $region49: #{tpu_custom_call.1} parent=39 // pred_check
          %p280 = pneg %p92
        $region50: #{tpu_custom_call.1} parent=39 // pred_check_branch
          %282 = sbr.rel (%p280) target = $region52
        $region51: #{tpu_custom_call.1} parent=39 // pred_region
          %283 = dma.done [#allocation9], 32
        $region52: #{tpu_custom_call.1} parent=39 // pred_fallthru
          _
        // Predicated region
        $region53: #{tpu_custom_call.1} parent=39 // pred_check
          %p284 = pneg %p113
        $region54: #{tpu_custom_call.1} parent=39 // pred_check_branch
          %286 = sbr.rel (%p284) target = $region56
        $region55: #{tpu_custom_call.1} parent=39 // pred_region
          %287 = dma.done [#allocation12], 16
        $region56: #{tpu_custom_call.1} parent=39 // pred_fallthru
          _
        %s288 = sand.u32 %s37, 1
        %s289 = scalar_lea.sflag [#allocation6], %s288
        %s290 = sand.u32 %s37, 1
        %s291 = smul.addr %s290, 2048
        %s292 = scalar_lea.vmem [#allocation5], %s291
        %p293 = pneg %p50
        %p294 = pneg %p47
        %p295 = pneg %p71
        %p296 = pneg %p68
        %p297 = pneg %p92
        %p298 = pneg %p89
        %p299 = pneg %p113
        %p300 = pneg %p110
        %p301 = pneg %p134
        %p302 = pneg %p131
        %p303 = pneg %p155
        %p304 = pneg %p152
        %p305 = pneg %p181
        %p306 = pneg %p178
        %s307 = sand.u32 %s168, 1
        %s308 = scalar_lea.sflag [#allocation15], %s307
        %s309 = sand.u32 %s168, 1
        %s310 = smul.addr %s309, 4
        %s311 = scalar_lea.vmem [#allocation14], %s310
        %s312 = smul.u32 64, %s29
        %s313 = smul.u32 4, %s29
        %p314 = scmp.eq.s32.totalorder %s29, 0
        // Predicated region
        $region57: #{tpu_custom_call.1} parent=39 // pred_check
          %p315 = pneg %p314
        $region58: #{tpu_custom_call.1} parent=39 // pred_check_branch
          %317 = sbr.rel (%p315) target = $region60
        $region59: #{tpu_custom_call.1} parent=39 // pred_region
          %vm318 = vcmask 0
          %319 = vst.msk [vmem:[#allocation2] sm:$0x1] %vm318, -inf
          %320 = vst.msk [vmem:[#allocation3] sm:$0x1] %vm318, 0.0
          %v321 = vlaneseq
          %vm322 = vcmp.ge.s32.totalorder %v321, 0
          %vm323 = vcmp.lt.s32.totalorder %v321, 512
          %vm324 = vmand %vm322, %vm323
          %325 = vst.msk [vmem:[#allocation13] sm:$0xf] %vm324, 0.0
        $region60: #{tpu_custom_call.1} parent=39 // pred_fallthru
          _
        %v326 = vld [vmem:[%s271] sm:$0xff]
        %v327 = vld [vmem:[%s271 + $0x8] sm:$0xff]
        %v328 = vld [vmem:[%s271 + $0x10] sm:$0xff]
        %v329 = vld [vmem:[%s271 + $0x18] sm:$0xff]
        %v330 = vld [vmem:[%s271 + $0x20] sm:$0xff]
        %v331 = vld [vmem:[%s271 + $0x28] sm:$0xff]
        %v332 = vld [vmem:[%s271 + $0x30] sm:$0xff]
        %v333 = vld [vmem:[%s271 + $0x38] sm:$0xff]
        %v334 = vld [vmem:[%s271 + $0x40] sm:$0xff]
        %v335 = vld [vmem:[%s271 + $0x48] sm:$0xff]
        %v336 = vld [vmem:[%s271 + $0x50] sm:$0xff]
        %v337 = vld [vmem:[%s271 + $0x58] sm:$0xff]
        %v338 = vld [vmem:[%s271 + $0x60] sm:$0xff]
        %v339 = vld [vmem:[%s271 + $0x68] sm:$0xff]
        %v340 = vld [vmem:[%s271 + $0x70] sm:$0xff]
        %v341 = vld [vmem:[%s271 + $0x78] sm:$0xff]
        %v342 = vld [vmem:[%s271 + $0x80] sm:$0xff]
        %v343 = vld [vmem:[%s271 + $0x88] sm:$0xff]
        %v344 = vld [vmem:[%s271 + $0x90] sm:$0xff]
        %v345 = vld [vmem:[%s271 + $0x98] sm:$0xff]
        %v346 = vld [vmem:[%s271 + $0xa0] sm:$0xff]
        %v347 = vld [vmem:[%s271 + $0xa8] sm:$0xff]
        %v348 = vld [vmem:[%s271 + $0xb0] sm:$0xff]
        %v349 = vld [vmem:[%s271 + $0xb8] sm:$0xff]
        %v350 = vld [vmem:[%s271 + $0xc0] sm:$0xff]
        %v351 = vld [vmem:[%s271 + $0xc8] sm:$0xff]
        %v352 = vld [vmem:[%s271 + $0xd0] sm:$0xff]
        %v353 = vld [vmem:[%s271 + $0xd8] sm:$0xff]
        %v354 = vld [vmem:[%s271 + $0xe0] sm:$0xff]
        %v355 = vld [vmem:[%s271 + $0xe8] sm:$0xff]
        %v356 = vld [vmem:[%s271 + $0xf0] sm:$0xff]
        %v357 = vld [vmem:[%s271 + $0xf8] sm:$0xff]
        %v358 = vld [vmem:[%s271 + $0x100] sm:$0xff]
        %v359 = vld [vmem:[%s271 + $0x108] sm:$0xff]
        %v360 = vld [vmem:[%s271 + $0x110] sm:$0xff]
        %v361 = vld [vmem:[%s271 + $0x118] sm:$0xff]
        %v362 = vld [vmem:[%s271 + $0x120] sm:$0xff]
        %v363 = vld [vmem:[%s271 + $0x128] sm:$0xff]
        %v364 = vld [vmem:[%s271 + $0x130] sm:$0xff]
        %v365 = vld [vmem:[%s271 + $0x138] sm:$0xff]
        %v366 = vld [vmem:[%s271 + $0x140] sm:$0xff]
        %v367 = vld [vmem:[%s271 + $0x148] sm:$0xff]
        %v368 = vld [vmem:[%s271 + $0x150] sm:$0xff]
        %v369 = vld [vmem:[%s271 + $0x158] sm:$0xff]
        %v370 = vld [vmem:[%s271 + $0x160] sm:$0xff]
        %v371 = vld [vmem:[%s271 + $0x168] sm:$0xff]
        %v372 = vld [vmem:[%s271 + $0x170] sm:$0xff]
        %v373 = vld [vmem:[%s271 + $0x178] sm:$0xff]
        %v374 = vld [vmem:[%s271 + $0x180] sm:$0xff]
        %v375 = vld [vmem:[%s271 + $0x188] sm:$0xff]
        %v376 = vld [vmem:[%s271 + $0x190] sm:$0xff]
        %v377 = vld [vmem:[%s271 + $0x198] sm:$0xff]
        %v378 = vld [vmem:[%s271 + $0x1a0] sm:$0xff]
        %v379 = vld [vmem:[%s271 + $0x1a8] sm:$0xff]
        %v380 = vld [vmem:[%s271 + $0x1b0] sm:$0xff]
        %v381 = vld [vmem:[%s271 + $0x1b8] sm:$0xff]
        %v382 = vld [vmem:[%s271 + $0x1c0] sm:$0xff]
        %v383 = vld [vmem:[%s271 + $0x1c8] sm:$0xff]
        %v384 = vld [vmem:[%s271 + $0x1d0] sm:$0xff]
        %v385 = vld [vmem:[%s271 + $0x1d8] sm:$0xff]
        %v386 = vld [vmem:[%s271 + $0x1e0] sm:$0xff]
        %v387 = vld [vmem:[%s271 + $0x1e8] sm:$0xff]
        %v388 = vld [vmem:[%s271 + $0x1f0] sm:$0xff]
        %v389 = vld [vmem:[%s271 + $0x1f8] sm:$0xff]
        %v390 = vld [vmem:[%s271 + $0x200] sm:$0xff]
        %v391 = vld [vmem:[%s271 + $0x208] sm:$0xff]
        %v392 = vld [vmem:[%s271 + $0x210] sm:$0xff]
        %v393 = vld [vmem:[%s271 + $0x218] sm:$0xff]
        %v394 = vld [vmem:[%s271 + $0x220] sm:$0xff]
        %v395 = vld [vmem:[%s271 + $0x228] sm:$0xff]
        %v396 = vld [vmem:[%s271 + $0x230] sm:$0xff]
        %v397 = vld [vmem:[%s271 + $0x238] sm:$0xff]
        %v398 = vld [vmem:[%s271 + $0x240] sm:$0xff]
        %v399 = vld [vmem:[%s271 + $0x248] sm:$0xff]
        %v400 = vld [vmem:[%s271 + $0x250] sm:$0xff]
        %v401 = vld [vmem:[%s271 + $0x258] sm:$0xff]
        %v402 = vld [vmem:[%s271 + $0x260] sm:$0xff]
        %v403 = vld [vmem:[%s271 + $0x268] sm:$0xff]
        %v404 = vld [vmem:[%s271 + $0x270] sm:$0xff]
        %v405 = vld [vmem:[%s271 + $0x278] sm:$0xff]
        %v406 = vld [vmem:[%s271 + $0x280] sm:$0xff]
        %v407 = vld [vmem:[%s271 + $0x288] sm:$0xff]
        %v408 = vld [vmem:[%s271 + $0x290] sm:$0xff]
        %v409 = vld [vmem:[%s271 + $0x298] sm:$0xff]
        %v410 = vld [vmem:[%s271 + $0x2a0] sm:$0xff]
        %v411 = vld [vmem:[%s271 + $0x2a8] sm:$0xff]
        %v412 = vld [vmem:[%s271 + $0x2b0] sm:$0xff]
        %v413 = vld [vmem:[%s271 + $0x2b8] sm:$0xff]
        %v414 = vld [vmem:[%s271 + $0x2c0] sm:$0xff]
        %v415 = vld [vmem:[%s271 + $0x2c8] sm:$0xff]
        %v416 = vld [vmem:[%s271 + $0x2d0] sm:$0xff]
        %v417 = vld [vmem:[%s271 + $0x2d8] sm:$0xff]
        %v418 = vld [vmem:[%s271 + $0x2e0] sm:$0xff]
        %v419 = vld [vmem:[%s271 + $0x2e8] sm:$0xff]
        %v420 = vld [vmem:[%s271 + $0x2f0] sm:$0xff]
        %v421 = vld [vmem:[%s271 + $0x2f8] sm:$0xff]
        %v422 = vld [vmem:[%s271 + $0x300] sm:$0xff]
        %v423 = vld [vmem:[%s271 + $0x308] sm:$0xff]
        %v424 = vld [vmem:[%s271 + $0x310] sm:$0xff]
        %v425 = vld [vmem:[%s271 + $0x318] sm:$0xff]
        %v426 = vld [vmem:[%s271 + $0x320] sm:$0xff]
        %v427 = vld [vmem:[%s271 + $0x328] sm:$0xff]
        %v428 = vld [vmem:[%s271 + $0x330] sm:$0xff]
        %v429 = vld [vmem:[%s271 + $0x338] sm:$0xff]
        %v430 = vld [vmem:[%s271 + $0x340] sm:$0xff]
        %v431 = vld [vmem:[%s271 + $0x348] sm:$0xff]
        %v432 = vld [vmem:[%s271 + $0x350] sm:$0xff]
        %v433 = vld [vmem:[%s271 + $0x358] sm:$0xff]
        %v434 = vld [vmem:[%s271 + $0x360] sm:$0xff]
        %v435 = vld [vmem:[%s271 + $0x368] sm:$0xff]
        %v436 = vld [vmem:[%s271 + $0x370] sm:$0xff]
        %v437 = vld [vmem:[%s271 + $0x378] sm:$0xff]
        %v438 = vld [vmem:[%s271 + $0x380] sm:$0xff]
        %v439 = vld [vmem:[%s271 + $0x388] sm:$0xff]
        %v440 = vld [vmem:[%s271 + $0x390] sm:$0xff]
        %v441 = vld [vmem:[%s271 + $0x398] sm:$0xff]
        %v442 = vld [vmem:[%s271 + $0x3a0] sm:$0xff]
        %v443 = vld [vmem:[%s271 + $0x3a8] sm:$0xff]
        %v444 = vld [vmem:[%s271 + $0x3b0] sm:$0xff]
        %v445 = vld [vmem:[%s271 + $0x3b8] sm:$0xff]
        %v446 = vld [vmem:[%s271 + $0x3c0] sm:$0xff]
        %v447 = vld [vmem:[%s271 + $0x3c8] sm:$0xff]
        %v448 = vld [vmem:[%s271 + $0x3d0] sm:$0xff]
        %v449 = vld [vmem:[%s271 + $0x3d8] sm:$0xff]
        %v450 = vld [vmem:[%s271 + $0x3e0] sm:$0xff]
        %v451 = vld [vmem:[%s271 + $0x3e8] sm:$0xff]
        %v452 = vld [vmem:[%s271 + $0x3f0] sm:$0xff]
        %v453 = vld [vmem:[%s271 + $0x3f8] sm:$0xff]
        %v454 = vld [vmem:[%s271 + $0x400] sm:$0xff]
        %v455 = vld [vmem:[%s271 + $0x408] sm:$0xff]
        %v456 = vld [vmem:[%s271 + $0x410] sm:$0xff]
        %v457 = vld [vmem:[%s271 + $0x418] sm:$0xff]
        %v458 = vld [vmem:[%s271 + $0x420] sm:$0xff]
        %v459 = vld [vmem:[%s271 + $0x428] sm:$0xff]
        %v460 = vld [vmem:[%s271 + $0x430] sm:$0xff]
        %v461 = vld [vmem:[%s271 + $0x438] sm:$0xff]
        %v462 = vld [vmem:[%s271 + $0x440] sm:$0xff]
        %v463 = vld [vmem:[%s271 + $0x448] sm:$0xff]
        %v464 = vld [vmem:[%s271 + $0x450] sm:$0xff]
        %v465 = vld [vmem:[%s271 + $0x458] sm:$0xff]
        %v466 = vld [vmem:[%s271 + $0x460] sm:$0xff]
        %v467 = vld [vmem:[%s271 + $0x468] sm:$0xff]
        %v468 = vld [vmem:[%s271 + $0x470] sm:$0xff]
        %v469 = vld [vmem:[%s271 + $0x478] sm:$0xff]
        %v470 = vld [vmem:[%s271 + $0x480] sm:$0xff]
        %v471 = vld [vmem:[%s271 + $0x488] sm:$0xff]
        %v472 = vld [vmem:[%s271 + $0x490] sm:$0xff]
        %v473 = vld [vmem:[%s271 + $0x498] sm:$0xff]
        %v474 = vld [vmem:[%s271 + $0x4a0] sm:$0xff]
        %v475 = vld [vmem:[%s271 + $0x4a8] sm:$0xff]
        %v476 = vld [vmem:[%s271 + $0x4b0] sm:$0xff]
        %v477 = vld [vmem:[%s271 + $0x4b8] sm:$0xff]
        %v478 = vld [vmem:[%s271 + $0x4c0] sm:$0xff]
        %v479 = vld [vmem:[%s271 + $0x4c8] sm:$0xff]
        %v480 = vld [vmem:[%s271 + $0x4d0] sm:$0xff]
        %v481 = vld [vmem:[%s271 + $0x4d8] sm:$0xff]
        %v482 = vld [vmem:[%s271 + $0x4e0] sm:$0xff]
        %v483 = vld [vmem:[%s271 + $0x4e8] sm:$0xff]
        %v484 = vld [vmem:[%s271 + $0x4f0] sm:$0xff]
        %v485 = vld [vmem:[%s271 + $0x4f8] sm:$0xff]
        %v486 = vld [vmem:[%s271 + $0x500] sm:$0xff]
        %v487 = vld [vmem:[%s271 + $0x508] sm:$0xff]
        %v488 = vld [vmem:[%s271 + $0x510] sm:$0xff]
        %v489 = vld [vmem:[%s271 + $0x518] sm:$0xff]
        %v490 = vld [vmem:[%s271 + $0x520] sm:$0xff]
        %v491 = vld [vmem:[%s271 + $0x528] sm:$0xff]
        %v492 = vld [vmem:[%s271 + $0x530] sm:$0xff]
        %v493 = vld [vmem:[%s271 + $0x538] sm:$0xff]
        %v494 = vld [vmem:[%s271 + $0x540] sm:$0xff]
        %v495 = vld [vmem:[%s271 + $0x548] sm:$0xff]
        %v496 = vld [vmem:[%s271 + $0x550] sm:$0xff]
        %v497 = vld [vmem:[%s271 + $0x558] sm:$0xff]
        %v498 = vld [vmem:[%s271 + $0x560] sm:$0xff]
        %v499 = vld [vmem:[%s271 + $0x568] sm:$0xff]
        %v500 = vld [vmem:[%s271 + $0x570] sm:$0xff]
        %v501 = vld [vmem:[%s271 + $0x578] sm:$0xff]
        %v502 = vld [vmem:[%s271 + $0x580] sm:$0xff]
        %v503 = vld [vmem:[%s271 + $0x588] sm:$0xff]
        %v504 = vld [vmem:[%s271 + $0x590] sm:$0xff]
        %v505 = vld [vmem:[%s271 + $0x598] sm:$0xff]
        %v506 = vld [vmem:[%s271 + $0x5a0] sm:$0xff]
        %v507 = vld [vmem:[%s271 + $0x5a8] sm:$0xff]
        %v508 = vld [vmem:[%s271 + $0x5b0] sm:$0xff]
        %v509 = vld [vmem:[%s271 + $0x5b8] sm:$0xff]
        %v510 = vld [vmem:[%s271 + $0x5c0] sm:$0xff]
        %v511 = vld [vmem:[%s271 + $0x5c8] sm:$0xff]
        %v512 = vld [vmem:[%s271 + $0x5d0] sm:$0xff]
        %v513 = vld [vmem:[%s271 + $0x5d8] sm:$0xff]
        %v514 = vld [vmem:[%s271 + $0x5e0] sm:$0xff]
        %v515 = vld [vmem:[%s271 + $0x5e8] sm:$0xff]
        %v516 = vld [vmem:[%s271 + $0x5f0] sm:$0xff]
        %v517 = vld [vmem:[%s271 + $0x5f8] sm:$0xff]
        %v518 = vld [vmem:[%s271 + $0x600] sm:$0xff]
        %v519 = vld [vmem:[%s271 + $0x608] sm:$0xff]
        %v520 = vld [vmem:[%s271 + $0x610] sm:$0xff]
        %v521 = vld [vmem:[%s271 + $0x618] sm:$0xff]
        %v522 = vld [vmem:[%s271 + $0x620] sm:$0xff]
        %v523 = vld [vmem:[%s271 + $0x628] sm:$0xff]
        %v524 = vld [vmem:[%s271 + $0x630] sm:$0xff]
        %v525 = vld [vmem:[%s271 + $0x638] sm:$0xff]
        %v526 = vld [vmem:[%s271 + $0x640] sm:$0xff]
        %v527 = vld [vmem:[%s271 + $0x648] sm:$0xff]
        %v528 = vld [vmem:[%s271 + $0x650] sm:$0xff]
        %v529 = vld [vmem:[%s271 + $0x658] sm:$0xff]
        %v530 = vld [vmem:[%s271 + $0x660] sm:$0xff]
        %v531 = vld [vmem:[%s271 + $0x668] sm:$0xff]
        %v532 = vld [vmem:[%s271 + $0x670] sm:$0xff]
        %v533 = vld [vmem:[%s271 + $0x678] sm:$0xff]
        %v534 = vld [vmem:[%s271 + $0x680] sm:$0xff]
        %v535 = vld [vmem:[%s271 + $0x688] sm:$0xff]
        %v536 = vld [vmem:[%s271 + $0x690] sm:$0xff]
        %v537 = vld [vmem:[%s271 + $0x698] sm:$0xff]
        %v538 = vld [vmem:[%s271 + $0x6a0] sm:$0xff]
        %v539 = vld [vmem:[%s271 + $0x6a8] sm:$0xff]
        %v540 = vld [vmem:[%s271 + $0x6b0] sm:$0xff]
        %v541 = vld [vmem:[%s271 + $0x6b8] sm:$0xff]
        %v542 = vld [vmem:[%s271 + $0x6c0] sm:$0xff]
        %v543 = vld [vmem:[%s271 + $0x6c8] sm:$0xff]
        %v544 = vld [vmem:[%s271 + $0x6d0] sm:$0xff]
        %v545 = vld [vmem:[%s271 + $0x6d8] sm:$0xff]
        %v546 = vld [vmem:[%s271 + $0x6e0] sm:$0xff]
        %v547 = vld [vmem:[%s271 + $0x6e8] sm:$0xff]
        %v548 = vld [vmem:[%s271 + $0x6f0] sm:$0xff]
        %v549 = vld [vmem:[%s271 + $0x6f8] sm:$0xff]
        %v550 = vld [vmem:[%s271 + $0x700] sm:$0xff]
        %v551 = vld [vmem:[%s271 + $0x708] sm:$0xff]
        %v552 = vld [vmem:[%s271 + $0x710] sm:$0xff]
        %v553 = vld [vmem:[%s271 + $0x718] sm:$0xff]
        %v554 = vld [vmem:[%s271 + $0x720] sm:$0xff]
        %v555 = vld [vmem:[%s271 + $0x728] sm:$0xff]
        %v556 = vld [vmem:[%s271 + $0x730] sm:$0xff]
        %v557 = vld [vmem:[%s271 + $0x738] sm:$0xff]
        %v558 = vld [vmem:[%s271 + $0x740] sm:$0xff]
        %v559 = vld [vmem:[%s271 + $0x748] sm:$0xff]
        %v560 = vld [vmem:[%s271 + $0x750] sm:$0xff]
        %v561 = vld [vmem:[%s271 + $0x758] sm:$0xff]
        %v562 = vld [vmem:[%s271 + $0x760] sm:$0xff]
        %v563 = vld [vmem:[%s271 + $0x768] sm:$0xff]
        %v564 = vld [vmem:[%s271 + $0x770] sm:$0xff]
        %v565 = vld [vmem:[%s271 + $0x778] sm:$0xff]
        %v566 = vld [vmem:[%s271 + $0x780] sm:$0xff]
        %v567 = vld [vmem:[%s271 + $0x788] sm:$0xff]
        %v568 = vld [vmem:[%s271 + $0x790] sm:$0xff]
        %v569 = vld [vmem:[%s271 + $0x798] sm:$0xff]
        %v570 = vld [vmem:[%s271 + $0x7a0] sm:$0xff]
        %v571 = vld [vmem:[%s271 + $0x7a8] sm:$0xff]
        %v572 = vld [vmem:[%s271 + $0x7b0] sm:$0xff]
        %v573 = vld [vmem:[%s271 + $0x7b8] sm:$0xff]
        %v574 = vld [vmem:[%s271 + $0x7c0] sm:$0xff]
        %v575 = vld [vmem:[%s271 + $0x7c8] sm:$0xff]
        %v576 = vld [vmem:[%s271 + $0x7d0] sm:$0xff]
        %v577 = vld [vmem:[%s271 + $0x7d8] sm:$0xff]
        %v578 = vld [vmem:[%s271 + $0x7e0] sm:$0xff]
        %v579 = vld [vmem:[%s271 + $0x7e8] sm:$0xff]
        %v580 = vld [vmem:[%s271 + $0x7f0] sm:$0xff]
        %v581 = vld [vmem:[%s271 + $0x7f8] sm:$0xff]
        %v582 = vld [vmem:[#allocation8] sm:$0xff]
        %v583 = vld [vmem:[#allocation8 + $0x8] sm:$0xff]
        %v584 = vld [vmem:[#allocation8 + $0x10] sm:$0xff]
        %v585 = vld [vmem:[#allocation8 + $0x18] sm:$0xff]
        %v586 = vld [vmem:[#allocation8 + $0x20] sm:$0xff]
        %v587 = vld [vmem:[#allocation8 + $0x28] sm:$0xff]
        %v588 = vld [vmem:[#allocation8 + $0x30] sm:$0xff]
        %v589 = vld [vmem:[#allocation8 + $0x38] sm:$0xff]
        %v590 = vld [vmem:[#allocation8 + $0x40] sm:$0xff]
        %v591 = vld [vmem:[#allocation8 + $0x48] sm:$0xff]
        %v592 = vld [vmem:[#allocation8 + $0x50] sm:$0xff]
        %v593 = vld [vmem:[#allocation8 + $0x58] sm:$0xff]
        %v594 = vld [vmem:[#allocation8 + $0x60] sm:$0xff]
        %v595 = vld [vmem:[#allocation8 + $0x68] sm:$0xff]
        %v596 = vld [vmem:[#allocation8 + $0x70] sm:$0xff]
        %v597 = vld [vmem:[#allocation8 + $0x78] sm:$0xff]
        %v598 = vld [vmem:[#allocation8 + $0x80] sm:$0xff]
        %v599 = vld [vmem:[#allocation8 + $0x88] sm:$0xff]
        %v600 = vld [vmem:[#allocation8 + $0x90] sm:$0xff]
        %v601 = vld [vmem:[#allocation8 + $0x98] sm:$0xff]
        %v602 = vld [vmem:[#allocation8 + $0xa0] sm:$0xff]
        %v603 = vld [vmem:[#allocation8 + $0xa8] sm:$0xff]
        %v604 = vld [vmem:[#allocation8 + $0xb0] sm:$0xff]
        %v605 = vld [vmem:[#allocation8 + $0xb8] sm:$0xff]
        %v606 = vld [vmem:[#allocation8 + $0xc0] sm:$0xff]
        %v607 = vld [vmem:[#allocation8 + $0xc8] sm:$0xff]
        %v608 = vld [vmem:[#allocation8 + $0xd0] sm:$0xff]
        %v609 = vld [vmem:[#allocation8 + $0xd8] sm:$0xff]
        %v610 = vld [vmem:[#allocation8 + $0xe0] sm:$0xff]
        %v611 = vld [vmem:[#allocation8 + $0xe8] sm:$0xff]
        %v612 = vld [vmem:[#allocation8 + $0xf0] sm:$0xff]
        %v613 = vld [vmem:[#allocation8 + $0xf8] sm:$0xff]
        %v614 = vld [vmem:[#allocation8 + $0x100] sm:$0xff]
        %v615 = vld [vmem:[#allocation8 + $0x108] sm:$0xff]
        %v616 = vld [vmem:[#allocation8 + $0x110] sm:$0xff]
        %v617 = vld [vmem:[#allocation8 + $0x118] sm:$0xff]
        %v618 = vld [vmem:[#allocation8 + $0x120] sm:$0xff]
        %v619 = vld [vmem:[#allocation8 + $0x128] sm:$0xff]
        %v620 = vld [vmem:[#allocation8 + $0x130] sm:$0xff]
        %v621 = vld [vmem:[#allocation8 + $0x138] sm:$0xff]
        %v622 = vld [vmem:[#allocation8 + $0x140] sm:$0xff]
        %v623 = vld [vmem:[#allocation8 + $0x148] sm:$0xff]
        %v624 = vld [vmem:[#allocation8 + $0x150] sm:$0xff]
        %v625 = vld [vmem:[#allocation8 + $0x158] sm:$0xff]
        %v626 = vld [vmem:[#allocation8 + $0x160] sm:$0xff]
        %v627 = vld [vmem:[#allocation8 + $0x168] sm:$0xff]
        %v628 = vld [vmem:[#allocation8 + $0x170] sm:$0xff]
        %v629 = vld [vmem:[#allocation8 + $0x178] sm:$0xff]
        %v630 = vld [vmem:[#allocation8 + $0x180] sm:$0xff]
        %v631 = vld [vmem:[#allocation8 + $0x188] sm:$0xff]
        %v632 = vld [vmem:[#allocation8 + $0x190] sm:$0xff]
        %v633 = vld [vmem:[#allocation8 + $0x198] sm:$0xff]
        %v634 = vld [vmem:[#allocation8 + $0x1a0] sm:$0xff]
        %v635 = vld [vmem:[#allocation8 + $0x1a8] sm:$0xff]
        %v636 = vld [vmem:[#allocation8 + $0x1b0] sm:$0xff]
        %v637 = vld [vmem:[#allocation8 + $0x1b8] sm:$0xff]
        %v638 = vld [vmem:[#allocation8 + $0x1c0] sm:$0xff]
        %v639 = vld [vmem:[#allocation8 + $0x1c8] sm:$0xff]
        %v640 = vld [vmem:[#allocation8 + $0x1d0] sm:$0xff]
        %v641 = vld [vmem:[#allocation8 + $0x1d8] sm:$0xff]
        %v642 = vld [vmem:[#allocation8 + $0x1e0] sm:$0xff]
        %v643 = vld [vmem:[#allocation8 + $0x1e8] sm:$0xff]
        %v644 = vld [vmem:[#allocation8 + $0x1f0] sm:$0xff]
        %v645 = vld [vmem:[#allocation8 + $0x1f8] sm:$0xff]
        %v646 = vld [vmem:[#allocation8 + $0x200] sm:$0xff]
        %v647 = vld [vmem:[#allocation8 + $0x208] sm:$0xff]
        %v648 = vld [vmem:[#allocation8 + $0x210] sm:$0xff]
        %v649 = vld [vmem:[#allocation8 + $0x218] sm:$0xff]
        %v650 = vld [vmem:[#allocation8 + $0x220] sm:$0xff]
        %v651 = vld [vmem:[#allocation8 + $0x228] sm:$0xff]
        %v652 = vld [vmem:[#allocation8 + $0x230] sm:$0xff]
        %v653 = vld [vmem:[#allocation8 + $0x238] sm:$0xff]
        %v654 = vld [vmem:[#allocation8 + $0x240] sm:$0xff]
        %v655 = vld [vmem:[#allocation8 + $0x248] sm:$0xff]
        %v656 = vld [vmem:[#allocation8 + $0x250] sm:$0xff]
        %v657 = vld [vmem:[#allocation8 + $0x258] sm:$0xff]
        %v658 = vld [vmem:[#allocation8 + $0x260] sm:$0xff]
        %v659 = vld [vmem:[#allocation8 + $0x268] sm:$0xff]
        %v660 = vld [vmem:[#allocation8 + $0x270] sm:$0xff]
        %v661 = vld [vmem:[#allocation8 + $0x278] sm:$0xff]
        %v662 = vld [vmem:[#allocation8 + $0x280] sm:$0xff]
        %v663 = vld [vmem:[#allocation8 + $0x288] sm:$0xff]
        %v664 = vld [vmem:[#allocation8 + $0x290] sm:$0xff]
        %v665 = vld [vmem:[#allocation8 + $0x298] sm:$0xff]
        %v666 = vld [vmem:[#allocation8 + $0x2a0] sm:$0xff]
        %v667 = vld [vmem:[#allocation8 + $0x2a8] sm:$0xff]
        %v668 = vld [vmem:[#allocation8 + $0x2b0] sm:$0xff]
        %v669 = vld [vmem:[#allocation8 + $0x2b8] sm:$0xff]
        %v670 = vld [vmem:[#allocation8 + $0x2c0] sm:$0xff]
        %v671 = vld [vmem:[#allocation8 + $0x2c8] sm:$0xff]
        %v672 = vld [vmem:[#allocation8 + $0x2d0] sm:$0xff]
        %v673 = vld [vmem:[#allocation8 + $0x2d8] sm:$0xff]
        %v674 = vld [vmem:[#allocation8 + $0x2e0] sm:$0xff]
        %v675 = vld [vmem:[#allocation8 + $0x2e8] sm:$0xff]
        %v676 = vld [vmem:[#allocation8 + $0x2f0] sm:$0xff]
        %v677 = vld [vmem:[#allocation8 + $0x2f8] sm:$0xff]
        %v678 = vld [vmem:[#allocation8 + $0x300] sm:$0xff]
        %v679 = vld [vmem:[#allocation8 + $0x308] sm:$0xff]
        %v680 = vld [vmem:[#allocation8 + $0x310] sm:$0xff]
        %v681 = vld [vmem:[#allocation8 + $0x318] sm:$0xff]
        %v682 = vld [vmem:[#allocation8 + $0x320] sm:$0xff]
        %v683 = vld [vmem:[#allocation8 + $0x328] sm:$0xff]
        %v684 = vld [vmem:[#allocation8 + $0x330] sm:$0xff]
        %v685 = vld [vmem:[#allocation8 + $0x338] sm:$0xff]
        %v686 = vld [vmem:[#allocation8 + $0x340] sm:$0xff]
        %v687 = vld [vmem:[#allocation8 + $0x348] sm:$0xff]
        %v688 = vld [vmem:[#allocation8 + $0x350] sm:$0xff]
        %v689 = vld [vmem:[#allocation8 + $0x358] sm:$0xff]
        %v690 = vld [vmem:[#allocation8 + $0x360] sm:$0xff]
        %v691 = vld [vmem:[#allocation8 + $0x368] sm:$0xff]
        %v692 = vld [vmem:[#allocation8 + $0x370] sm:$0xff]
        %v693 = vld [vmem:[#allocation8 + $0x378] sm:$0xff]
        %v694 = vld [vmem:[#allocation8 + $0x380] sm:$0xff]
        %v695 = vld [vmem:[#allocation8 + $0x388] sm:$0xff]
        %v696 = vld [vmem:[#allocation8 + $0x390] sm:$0xff]
        %v697 = vld [vmem:[#allocation8 + $0x398] sm:$0xff]
        %v698 = vld [vmem:[#allocation8 + $0x3a0] sm:$0xff]
        %v699 = vld [vmem:[#allocation8 + $0x3a8] sm:$0xff]
        %v700 = vld [vmem:[#allocation8 + $0x3b0] sm:$0xff]
        %v701 = vld [vmem:[#allocation8 + $0x3b8] sm:$0xff]
        %v702 = vld [vmem:[#allocation8 + $0x3c0] sm:$0xff]
        %v703 = vld [vmem:[#allocation8 + $0x3c8] sm:$0xff]
        %v704 = vld [vmem:[#allocation8 + $0x3d0] sm:$0xff]
        %v705 = vld [vmem:[#allocation8 + $0x3d8] sm:$0xff]
        %v706 = vld [vmem:[#allocation8 + $0x3e0] sm:$0xff]
        %v707 = vld [vmem:[#allocation8 + $0x3e8] sm:$0xff]
        %v708 = vld [vmem:[#allocation8 + $0x3f0] sm:$0xff]
        %v709 = vld [vmem:[#allocation8 + $0x3f8] sm:$0xff]
        %v710 = vld [vmem:[#allocation10] sm:$0x3]
        %v712 = vlaneseq
        %v713 = vshrl.u32 %v712, 7
        %v714 = vsub.s32 0, %v713
        %v715 = vrot.slane %v710, %v714
        %v716 = vlaneseq
        %v717 = vshrl.u32 %v716, 7
        %v718 = vsub.s32 1, %v717
        %v719 = vrot.slane %v710, %v718
        %722 = vmatprep.subr.mxu0 %v583
        %723 = vmatpush1.msra.mxu0 %v582
        %724 = vmatprep.subr.mxu0 %v585
        %725 = vmatpush1.msra.mxu0 %v584
        %726 = vmatprep.subr.mxu0 %v587
        %727 = vmatpush1.msra.mxu0 %v586
        %728 = vmatprep.subr.mxu0 %v589
        %729 = vmatpush1.msra.mxu0 %v588
        %730 = vmatprep.subr.mxu0 %v591
        %731 = vmatpush1.msra.mxu0 %v590
        %732 = vmatprep.subr.mxu0 %v593
        %733 = vmatpush1.msra.mxu0 %v592
        %734 = vmatprep.subr.mxu0 %v595
        %735 = vmatpush1.msra.mxu0 %v594
        %736 = vmatprep.subr.mxu0 %v597
        %737 = vmatpush1.msra.mxu0 %v596
        %738 = vmatprep.subr.mxu0 %v599
        %739 = vmatpush1.msra.mxu0 %v598
        %740 = vmatprep.subr.mxu0 %v601
        %741 = vmatpush1.msra.mxu0 %v600
        %742 = vmatprep.subr.mxu0 %v603
        %743 = vmatpush1.msra.mxu0 %v602
        %744 = vmatprep.subr.mxu0 %v605
        %745 = vmatpush1.msra.mxu0 %v604
        %746 = vmatprep.subr.mxu0 %v607
        %747 = vmatpush1.msra.mxu0 %v606
        %748 = vmatprep.subr.mxu0 %v609
        %749 = vmatpush1.msra.mxu0 %v608
        %750 = vmatprep.subr.mxu0 %v611
        %751 = vmatpush1.msra.mxu0 %v610
        %752 = vmatprep.subr.mxu0 %v613
        %753 = vmatpush1.msra.mxu0 %v612
        %754 = vmatprep.subr.mxu0 %v615
        %755 = vmatpush1.msra.mxu0 %v614
        %756 = vmatprep.subr.mxu0 %v617
        %757 = vmatpush1.msra.mxu0 %v616
        %758 = vmatprep.subr.mxu0 %v619
        %759 = vmatpush1.msra.mxu0 %v618
        %760 = vmatprep.subr.mxu0 %v621
        %761 = vmatpush1.msra.mxu0 %v620
        %762 = vmatprep.subr.mxu0 %v623
        %763 = vmatpush1.msra.mxu0 %v622
        %764 = vmatprep.subr.mxu0 %v625
        %765 = vmatpush1.msra.mxu0 %v624
        %766 = vmatprep.subr.mxu0 %v627
        %767 = vmatpush1.msra.mxu0 %v626
        %768 = vmatprep.subr.mxu0 %v629
        %769 = vmatpush1.msra.mxu0 %v628
        %770 = vmatprep.subr.mxu0 %v631
        %771 = vmatpush1.msra.mxu0 %v630
        %772 = vmatprep.subr.mxu0 %v633
        %773 = vmatpush1.msra.mxu0 %v632
        %774 = vmatprep.subr.mxu0 %v635
        %775 = vmatpush1.msra.mxu0 %v634
        %776 = vmatprep.subr.mxu0 %v637
        %777 = vmatpush1.msra.mxu0 %v636
        %778 = vmatprep.subr.mxu0 %v639
        %779 = vmatpush1.msra.mxu0 %v638
        %780 = vmatprep.subr.mxu0 %v641
        %781 = vmatpush1.msra.mxu0 %v640
        %782 = vmatprep.subr.mxu0 %v643
        %783 = vmatpush1.msra.mxu0 %v642
        %784 = vmatprep.subr.mxu0 %v645
        %785 = vmatpush1.msra.mxu0 %v644
        %786 = vmatprep.mubr.f32.mxu0 %v327
        %787 = vmatmul.mubr.f32.gmra.mrb[0].mxu0 %v326
        %v788 = vpop.f32.mrb[0].mxu0
        %v789 = vadd.f32 %v715, %v788
        %v790 = vpop.f32.mrb[0].mxu0
        %v791 = vadd.f32 %v719, %v790
        %792 = vmatprep.mubr.f32.mxu0 %v331
        %793 = vmatmul.mubr.f32.gmra.mrb[0].mxu0 %v330
        %v794 = vpop.f32.mrb[0].mxu0
        %v795 = vadd.f32 %v715, %v794
        %v796 = vpop.f32.mrb[0].mxu0
        %v797 = vadd.f32 %v719, %v796
        %798 = vmatprep.mubr.f32.mxu0 %v335
        %799 = vmatmul.mubr.f32.gmra.mrb[0].mxu0 %v334
        %v800 = vpop.f32.mrb[0].mxu0
        %v801 = vadd.f32 %v715, %v800
        %v802 = vpop.f32.mrb[0].mxu0
        %v803 = vadd.f32 %v719, %v802
        %804 = vmatprep.mubr.f32.mxu0 %v339
        %805 = vmatmul.mubr.f32.gmra.mrb[0].mxu0 %v338
        %v806 = vpop.f32.mrb[0].mxu0
        %v807 = vadd.f32 %v715, %v806
        %v808 = vpop.f32.mrb[0].mxu0
        %v809 = vadd.f32 %v719, %v808
        %810 = vmatprep.mubr.f32.mxu0 %v343
        %811 = vmatmul.mubr.f32.gmra.mrb[0].mxu0 %v342
        %v812 = vpop.f32.mrb[0].mxu0
        %v813 = vadd.f32 %v715, %v812
        %v814 = vpop.f32.mrb[0].mxu0
        %v815 = vadd.f32 %v719, %v814
        %816 = vmatprep.mubr.f32.mxu0 %v347
        %817 = vmatmul.mubr.f32.gmra.mrb[0].mxu0 %v346
        %v818 = vpop.f32.mrb[0].mxu0
        %v819 = vadd.f32 %v715, %v818
        %v820 = vpop.f32.mrb[0].mxu0
        %v821 = vadd.f32 %v719, %v820
        %822 = vmatprep.mubr.f32.mxu0 %v351
        %823 = vmatmul.mubr.f32.gmra.mrb[0].mxu0 %v350
        %v824 = vpop.f32.mrb[0].mxu0
        %v825 = vadd.f32 %v715, %v824
        %v826 = vpop.f32.mrb[0].mxu0
        %v827 = vadd.f32 %v719, %v826
        %828 = vmatprep.mubr.f32.mxu0 %v355
        %829 = vmatmul.mubr.f32.gmra.mrb[0].mxu0 %v354
        %v830 = vpop.f32.mrb[0].mxu0
        %v831 = vadd.f32 %v715, %v830
        %v832 = vpop.f32.mrb[0].mxu0
        %v833 = vadd.f32 %v719, %v832
        %834 = vmatprep.mubr.f32.mxu0 %v359
        %835 = vmatmul.mubr.f32.gmra.mrb[0].mxu0 %v358
        %v836 = vpop.f32.mrb[0].mxu0
        %v837 = vadd.f32 %v715, %v836
        %v838 = vpop.f32.mrb[0].mxu0
        %v839 = vadd.f32 %v719, %v838
        %840 = vmatprep.mubr.f32.mxu0 %v363
        %841 = vmatmul.mubr.f32.gmra.mrb[0].mxu0 %v362
        %v842 = vpop.f32.mrb[0].mxu0
        %v843 = vadd.f32 %v715, %v842
        %v844 = vpop.f32.mrb[0].mxu0
        %v845 = vadd.f32 %v719, %v844
        %846 = vmatprep.mubr.f32.mxu0 %v367
        %847 = vmatmul.mubr.f32.gmra.mrb[0].mxu0 %v366
        %v848 = vpop.f32.mrb[0].mxu0
        %v849 = vadd.f32 %v715, %v848
        %v850 = vpop.f32.mrb[0].mxu0
        %v851 = vadd.f32 %v719, %v850
        %852 = vmatprep.mubr.f32.mxu0 %v371
        %853 = vmatmul.mubr.f32.gmra.mrb[0].mxu0 %v370
        %v854 = vpop.f32.mrb[0].mxu0
        %v855 = vadd.f32 %v715, %v854
        %v856 = vpop.f32.mrb[0].mxu0
        %v857 = vadd.f32 %v719, %v856
        %858 = vmatprep.mubr.f32.mxu0 %v375
        %859 = vmatmul.mubr.f32.gmra.mrb[0].mxu0 %v374
        %v860 = vpop.f32.mrb[0].mxu0
        %v861 = vadd.f32 %v715, %v860
        %v862 = vpop.f32.mrb[0].mxu0
        %v863 = vadd.f32 %v719, %v862
        %864 = vmatprep.mubr.f32.mxu0 %v379
        %865 = vmatmul.mubr.f32.gmra.mrb[0].mxu0 %v378
        %v866 = vpop.f32.mrb[0].mxu0
        %v867 = vadd.f32 %v715, %v866
        %v868 = vpop.f32.mrb[0].mxu0
        %v869 = vadd.f32 %v719, %v868
        %870 = vmatprep.mubr.f32.mxu0 %v383
        %871 = vmatmul.mubr.f32.gmra.mrb[0].mxu0 %v382
        %v872 = vpop.f32.mrb[0].mxu0
        %v873 = vadd.f32 %v715, %v872
        %v874 = vpop.f32.mrb[0].mxu0
        %v875 = vadd.f32 %v719, %v874
        %876 = vmatprep.mubr.f32.mxu0 %v387
        %877 = vmatmul.mubr.f32.gmra.mrb[0].mxu0 %v386
        %v878 = vpop.f32.mrb[0].mxu0
        %v879 = vadd.f32 %v715, %v878
        %v880 = vpop.f32.mrb[0].mxu0
        %v881 = vadd.f32 %v719, %v880
        %882 = vmatprep.mubr.f32.mxu0 %v391
        %883 = vmatmul.mubr.f32.gmra.mrb[0].mxu0 %v390
        %v884 = vpop.f32.mrb[0].mxu0
        %v885 = vadd.f32 %v715, %v884
        %v886 = vpop.f32.mrb[0].mxu0
        %v887 = vadd.f32 %v719, %v886
        %888 = vmatprep.mubr.f32.mxu0 %v395
        %889 = vmatmul.mubr.f32.gmra.mrb[0].mxu0 %v394
        %v890 = vpop.f32.mrb[0].mxu0
        %v891 = vadd.f32 %v715, %v890
        %v892 = vpop.f32.mrb[0].mxu0
        %v893 = vadd.f32 %v719, %v892
        %894 = vmatprep.mubr.f32.mxu0 %v399
        %895 = vmatmul.mubr.f32.gmra.mrb[0].mxu0 %v398
        %v896 = vpop.f32.mrb[0].mxu0
        %v897 = vadd.f32 %v715, %v896
        %v898 = vpop.f32.mrb[0].mxu0
        %v899 = vadd.f32 %v719, %v898
        %900 = vmatprep.mubr.f32.mxu0 %v403
        %901 = vmatmul.mubr.f32.gmra.mrb[0].mxu0 %v402
        %v902 = vpop.f32.mrb[0].mxu0
        %v903 = vadd.f32 %v715, %v902
        %v904 = vpop.f32.mrb[0].mxu0
        %v905 = vadd.f32 %v719, %v904
        %906 = vmatprep.mubr.f32.mxu0 %v407
        %907 = vmatmul.mubr.f32.gmra.mrb[0].mxu0 %v406
        %v908 = vpop.f32.mrb[0].mxu0
        %v909 = vadd.f32 %v715, %v908
        %v910 = vpop.f32.mrb[0].mxu0
        %v911 = vadd.f32 %v719, %v910
        %912 = vmatprep.mubr.f32.mxu0 %v411
        %913 = vmatmul.mubr.f32.gmra.mrb[0].mxu0 %v410
        %v914 = vpop.f32.mrb[0].mxu0
        %v915 = vadd.f32 %v715, %v914
        %v916 = vpop.f32.mrb[0].mxu0
        %v917 = vadd.f32 %v719, %v916
        %918 = vmatprep.mubr.f32.mxu0 %v415
        %919 = vmatmul.mubr.f32.gmra.mrb[0].mxu0 %v414
        %v920 = vpop.f32.mrb[0].mxu0
        %v921 = vadd.f32 %v715, %v920
        %v922 = vpop.f32.mrb[0].mxu0
        %v923 = vadd.f32 %v719, %v922
        %924 = vmatprep.mubr.f32.mxu0 %v419
        %925 = vmatmul.mubr.f32.gmra.mrb[0].mxu0 %v418
        %v926 = vpop.f32.mrb[0].mxu0
        %v927 = vadd.f32 %v715, %v926
        %v928 = vpop.f32.mrb[0].mxu0
        %v929 = vadd.f32 %v719, %v928
        %930 = vmatprep.mubr.f32.mxu0 %v423
        %931 = vmatmul.mubr.f32.gmra.mrb[0].mxu0 %v422
        %v932 = vpop.f32.mrb[0].mxu0
        %v933 = vadd.f32 %v715, %v932
        %v934 = vpop.f32.mrb[0].mxu0
        %v935 = vadd.f32 %v719, %v934
        %936 = vmatprep.mubr.f32.mxu0 %v427
        %937 = vmatmul.mubr.f32.gmra.mrb[0].mxu0 %v426
        %v938 = vpop.f32.mrb[0].mxu0
        %v939 = vadd.f32 %v715, %v938
        %v940 = vpop.f32.mrb[0].mxu0
        %v941 = vadd.f32 %v719, %v940
        %942 = vmatprep.mubr.f32.mxu0 %v431
        %943 = vmatmul.mubr.f32.gmra.mrb[0].mxu0 %v430
        %v944 = vpop.f32.mrb[0].mxu0
        %v945 = vadd.f32 %v715, %v944
        %v946 = vpop.f32.mrb[0].mxu0
        %v947 = vadd.f32 %v719, %v946
        %948 = vmatprep.mubr.f32.mxu0 %v435
        %949 = vmatmul.mubr.f32.gmra.mrb[0].mxu0 %v434
        %v950 = vpop.f32.mrb[0].mxu0
        %v951 = vadd.f32 %v715, %v950
        %v952 = vpop.f32.mrb[0].mxu0
        %v953 = vadd.f32 %v719, %v952
        %954 = vmatprep.mubr.f32.mxu0 %v439
        %955 = vmatmul.mubr.f32.gmra.mrb[0].mxu0 %v438
        %v956 = vpop.f32.mrb[0].mxu0
        %v957 = vadd.f32 %v715, %v956
        %v958 = vpop.f32.mrb[0].mxu0
        %v959 = vadd.f32 %v719, %v958
        %960 = vmatprep.mubr.f32.mxu0 %v443
        %961 = vmatmul.mubr.f32.gmra.mrb[0].mxu0 %v442
        %v962 = vpop.f32.mrb[0].mxu0
        %v963 = vadd.f32 %v715, %v962
        %v964 = vpop.f32.mrb[0].mxu0
        %v965 = vadd.f32 %v719, %v964
        %966 = vmatprep.mubr.f32.mxu0 %v447
        %967 = vmatmul.mubr.f32.gmra.mrb[0].mxu0 %v446
        %v968 = vpop.f32.mrb[0].mxu0
        %v969 = vadd.f32 %v715, %v968
        %v970 = vpop.f32.mrb[0].mxu0
        %v971 = vadd.f32 %v719, %v970
        %972 = vmatprep.mubr.f32.mxu0 %v451
        %973 = vmatmul.mubr.f32.gmra.mrb[0].mxu0 %v450
        %v974 = vpop.f32.mrb[0].mxu0
        %v975 = vadd.f32 %v715, %v974
        %v976 = vpop.f32.mrb[0].mxu0
        %v977 = vadd.f32 %v719, %v976
        %978 = vmatprep.mubr.f32.mxu0 %v455
        %979 = vmatmul.mubr.f32.gmra.mrb[0].mxu0 %v454
        %v980 = vpop.f32.mrb[0].mxu0
        %v981 = vadd.f32 %v715, %v980
        %v982 = vpop.f32.mrb[0].mxu0
        %v983 = vadd.f32 %v719, %v982
        %984 = vmatprep.mubr.f32.mxu0 %v459
        %985 = vmatmul.mubr.f32.gmra.mrb[0].mxu0 %v458
        %v986 = vpop.f32.mrb[0].mxu0
        %v987 = vadd.f32 %v715, %v986
        %v988 = vpop.f32.mrb[0].mxu0
        %v989 = vadd.f32 %v719, %v988
        %990 = vmatprep.mubr.f32.mxu0 %v463
        %991 = vmatmul.mubr.f32.gmra.mrb[0].mxu0 %v462
        %v992 = vpop.f32.mrb[0].mxu0
        %v993 = vadd.f32 %v715, %v992
        %v994 = vpop.f32.mrb[0].mxu0
        %v995 = vadd.f32 %v719, %v994
        %996 = vmatprep.mubr.f32.mxu0 %v467
        %997 = vmatmul.mubr.f32.gmra.mrb[0].mxu0 %v466
        %v998 = vpop.f32.mrb[0].mxu0
        %v999 = vadd.f32 %v715, %v998
        %v1000 = vpop.f32.mrb[0].mxu0
        %v1001 = vadd.f32 %v719, %v1000
        %1002 = vmatprep.mubr.f32.mxu0 %v471
        %1003 = vmatmul.mubr.f32.gmra.mrb[0].mxu0 %v470
        %v1004 = vpop.f32.mrb[0].mxu0
        %v1005 = vadd.f32 %v715, %v1004
        %v1006 = vpop.f32.mrb[0].mxu0
        %v1007 = vadd.f32 %v719, %v1006
        %1008 = vmatprep.mubr.f32.mxu0 %v475
        %1009 = vmatmul.mubr.f32.gmra.mrb[0].mxu0 %v474
        %v1010 = vpop.f32.mrb[0].mxu0
        %v1011 = vadd.f32 %v715, %v1010
        %v1012 = vpop.f32.mrb[0].mxu0
        %v1013 = vadd.f32 %v719, %v1012
        %1014 = vmatprep.mubr.f32.mxu0 %v479
        %1015 = vmatmul.mubr.f32.gmra.mrb[0].mxu0 %v478
        %v1016 = vpop.f32.mrb[0].mxu0
        %v1017 = vadd.f32 %v715, %v1016
        %v1018 = vpop.f32.mrb[0].mxu0
        %v1019 = vadd.f32 %v719, %v1018
        %1020 = vmatprep.mubr.f32.mxu0 %v483
        %1021 = vmatmul.mubr.f32.gmra.mrb[0].mxu0 %v482
        %v1022 = vpop.f32.mrb[0].mxu0
        %v1023 = vadd.f32 %v715, %v1022
        %v1024 = vpop.f32.mrb[0].mxu0
        %v1025 = vadd.f32 %v719, %v1024
        %1026 = vmatprep.mubr.f32.mxu0 %v487
        %1027 = vmatmul.mubr.f32.gmra.mrb[0].mxu0 %v486
        %v1028 = vpop.f32.mrb[0].mxu0
        %v1029 = vadd.f32 %v715, %v1028
        %v1030 = vpop.f32.mrb[0].mxu0
        %v1031 = vadd.f32 %v719, %v1030
        %1032 = vmatprep.mubr.f32.mxu0 %v491
        %1033 = vmatmul.mubr.f32.gmra.mrb[0].mxu0 %v490
        %v1034 = vpop.f32.mrb[0].mxu0
        %v1035 = vadd.f32 %v715, %v1034
        %v1036 = vpop.f32.mrb[0].mxu0
        %v1037 = vadd.f32 %v719, %v1036
        %1038 = vmatprep.mubr.f32.mxu0 %v495
        %1039 = vmatmul.mubr.f32.gmra.mrb[0].mxu0 %v494
        %v1040 = vpop.f32.mrb[0].mxu0
        %v1041 = vadd.f32 %v715, %v1040
        %v1042 = vpop.f32.mrb[0].mxu0
        %v1043 = vadd.f32 %v719, %v1042
        %1044 = vmatprep.mubr.f32.mxu0 %v499
        %1045 = vmatmul.mubr.f32.gmra.mrb[0].mxu0 %v498
        %v1046 = vpop.f32.mrb[0].mxu0
        %v1047 = vadd.f32 %v715, %v1046
        %v1048 = vpop.f32.mrb[0].mxu0
        %v1049 = vadd.f32 %v719, %v1048
        %1050 = vmatprep.mubr.f32.mxu0 %v503
        %1051 = vmatmul.mubr.f32.gmra.mrb[0].mxu0 %v502
        %v1052 = vpop.f32.mrb[0].mxu0
        %v1053 = vadd.f32 %v715, %v1052
        %v1054 = vpop.f32.mrb[0].mxu0
        %v1055 = vadd.f32 %v719, %v1054
        %1056 = vmatprep.mubr.f32.mxu0 %v507
        %1057 = vmatmul.mubr.f32.gmra.mrb[0].mxu0 %v506
        %v1058 = vpop.f32.mrb[0].mxu0
        %v1059 = vadd.f32 %v715, %v1058
        %v1060 = vpop.f32.mrb[0].mxu0
        %v1061 = vadd.f32 %v719, %v1060
        %1062 = vmatprep.mubr.f32.mxu0 %v511
        %1063 = vmatmul.mubr.f32.gmra.mrb[0].mxu0 %v510
        %v1064 = vpop.f32.mrb[0].mxu0
        %v1065 = vadd.f32 %v715, %v1064
        %v1066 = vpop.f32.mrb[0].mxu0
        %v1067 = vadd.f32 %v719, %v1066
        %1068 = vmatprep.mubr.f32.mxu0 %v515
        %1069 = vmatmul.mubr.f32.gmra.mrb[0].mxu0 %v514
        %v1070 = vpop.f32.mrb[0].mxu0
        %v1071 = vadd.f32 %v715, %v1070
        %v1072 = vpop.f32.mrb[0].mxu0
        %v1073 = vadd.f32 %v719, %v1072
        %1074 = vmatprep.mubr.f32.mxu0 %v519
        %1075 = vmatmul.mubr.f32.gmra.mrb[0].mxu0 %v518
        %v1076 = vpop.f32.mrb[0].mxu0
        %v1077 = vadd.f32 %v715, %v1076
        %v1078 = vpop.f32.mrb[0].mxu0
        %v1079 = vadd.f32 %v719, %v1078
        %1080 = vmatprep.mubr.f32.mxu0 %v523
        %1081 = vmatmul.mubr.f32.gmra.mrb[0].mxu0 %v522
        %v1082 = vpop.f32.mrb[0].mxu0
        %v1083 = vadd.f32 %v715, %v1082
        %v1084 = vpop.f32.mrb[0].mxu0
        %v1085 = vadd.f32 %v719, %v1084
        %1086 = vmatprep.mubr.f32.mxu0 %v527
        %1087 = vmatmul.mubr.f32.gmra.mrb[0].mxu0 %v526
        %v1088 = vpop.f32.mrb[0].mxu0
        %v1089 = vadd.f32 %v715, %v1088
        %v1090 = vpop.f32.mrb[0].mxu0
        %v1091 = vadd.f32 %v719, %v1090
        %1092 = vmatprep.mubr.f32.mxu0 %v531
        %1093 = vmatmul.mubr.f32.gmra.mrb[0].mxu0 %v530
        %v1094 = vpop.f32.mrb[0].mxu0
        %v1095 = vadd.f32 %v715, %v1094
        %v1096 = vpop.f32.mrb[0].mxu0
        %v1097 = vadd.f32 %v719, %v1096
        %1098 = vmatprep.mubr.f32.mxu0 %v535
        %1099 = vmatmul.mubr.f32.gmra.mrb[0].mxu0 %v534
        %v1100 = vpop.f32.mrb[0].mxu0
        %v1101 = vadd.f32 %v715, %v1100
        %v1102 = vpop.f32.mrb[0].mxu0
        %v1103 = vadd.f32 %v719, %v1102
        %1104 = vmatprep.mubr.f32.mxu0 %v539
        %1105 = vmatmul.mubr.f32.gmra.mrb[0].mxu0 %v538
        %v1106 = vpop.f32.mrb[0].mxu0
        %v1107 = vadd.f32 %v715, %v1106
        %v1108 = vpop.f32.mrb[0].mxu0
        %v1109 = vadd.f32 %v719, %v1108
        %1110 = vmatprep.mubr.f32.mxu0 %v543
        %1111 = vmatmul.mubr.f32.gmra.mrb[0].mxu0 %v542
        %v1112 = vpop.f32.mrb[0].mxu0
        %v1113 = vadd.f32 %v715, %v1112
        %v1114 = vpop.f32.mrb[0].mxu0
        %v1115 = vadd.f32 %v719, %v1114
        %1116 = vmatprep.mubr.f32.mxu0 %v547
        %1117 = vmatmul.mubr.f32.gmra.mrb[0].mxu0 %v546
        %v1118 = vpop.f32.mrb[0].mxu0
        %v1119 = vadd.f32 %v715, %v1118
        %v1120 = vpop.f32.mrb[0].mxu0
        %v1121 = vadd.f32 %v719, %v1120
        %1122 = vmatprep.mubr.f32.mxu0 %v551
        %1123 = vmatmul.mubr.f32.gmra.mrb[0].mxu0 %v550
        %v1124 = vpop.f32.mrb[0].mxu0
        %v1125 = vadd.f32 %v715, %v1124
        %v1126 = vpop.f32.mrb[0].mxu0
        %v1127 = vadd.f32 %v719, %v1126
        %1128 = vmatprep.mubr.f32.mxu0 %v555
        %1129 = vmatmul.mubr.f32.gmra.mrb[0].mxu0 %v554
        %v1130 = vpop.f32.mrb[0].mxu0
        %v1131 = vadd.f32 %v715, %v1130
        %v1132 = vpop.f32.mrb[0].mxu0
        %v1133 = vadd.f32 %v719, %v1132
        %1134 = vmatprep.mubr.f32.mxu0 %v559
        %1135 = vmatmul.mubr.f32.gmra.mrb[0].mxu0 %v558
        %v1136 = vpop.f32.mrb[0].mxu0
        %v1137 = vadd.f32 %v715, %v1136
        %v1138 = vpop.f32.mrb[0].mxu0
        %v1139 = vadd.f32 %v719, %v1138
        %1140 = vmatprep.mubr.f32.mxu0 %v563
        %1141 = vmatmul.mubr.f32.gmra.mrb[0].mxu0 %v562
        %v1142 = vpop.f32.mrb[0].mxu0
        %v1143 = vadd.f32 %v715, %v1142
        %v1144 = vpop.f32.mrb[0].mxu0
        %v1145 = vadd.f32 %v719, %v1144
        %1146 = vmatprep.mubr.f32.mxu0 %v567
        %1147 = vmatmul.mubr.f32.gmra.mrb[0].mxu0 %v566
        %v1148 = vpop.f32.mrb[0].mxu0
        %v1149 = vadd.f32 %v715, %v1148
        %v1150 = vpop.f32.mrb[0].mxu0
        %v1151 = vadd.f32 %v719, %v1150
        %1152 = vmatprep.mubr.f32.mxu0 %v571
        %1153 = vmatmul.mubr.f32.gmra.mrb[0].mxu0 %v570
        %v1154 = vpop.f32.mrb[0].mxu0
        %v1155 = vadd.f32 %v715, %v1154
        %v1156 = vpop.f32.mrb[0].mxu0
        %v1157 = vadd.f32 %v719, %v1156
        %1158 = vmatprep.mubr.f32.mxu0 %v575
        %1159 = vmatmul.mubr.f32.gmra.mrb[0].mxu0 %v574
        %v1160 = vpop.f32.mrb[0].mxu0
        %v1161 = vadd.f32 %v715, %v1160
        %v1162 = vpop.f32.mrb[0].mxu0
        %v1163 = vadd.f32 %v719, %v1162
        %1164 = vmatprep.mubr.f32.mxu0 %v579
        %1165 = vmatmul.mubr.f32.gmra.mrb[0].mxu0 %v578
        %v1166 = vpop.f32.mrb[0].mxu0
        %v1167 = vadd.f32 %v715, %v1166
        %v1168 = vpop.f32.mrb[0].mxu0
        %v1169 = vadd.f32 %v719, %v1168
        %1170 = vdwg.mxu0
        %1171 = vmatprep.subr.mxu0 %v647
        %1172 = vmatpush1.msra.mxu0 %v646
        %1173 = vmatprep.subr.mxu0 %v649
        %1174 = vmatpush1.msra.mxu0 %v648
        %1175 = vmatprep.subr.mxu0 %v651
        %1176 = vmatpush1.msra.mxu0 %v650
        %1177 = vmatprep.subr.mxu0 %v653
        %1178 = vmatpush1.msra.mxu0 %v652
        %1179 = vmatprep.subr.mxu0 %v655
        %1180 = vmatpush1.msra.mxu0 %v654
        %1181 = vmatprep.subr.mxu0 %v657
        %1182 = vmatpush1.msra.mxu0 %v656
        %1183 = vmatprep.subr.mxu0 %v659
        %1184 = vmatpush1.msra.mxu0 %v658
        %1185 = vmatprep.subr.mxu0 %v661
        %1186 = vmatpush1.msra.mxu0 %v660
        %1187 = vmatprep.subr.mxu0 %v663
        %1188 = vmatpush1.msra.mxu0 %v662
        %1189 = vmatprep.subr.mxu0 %v665
        %1190 = vmatpush1.msra.mxu0 %v664
        %1191 = vmatprep.subr.mxu0 %v667
        %1192 = vmatpush1.msra.mxu0 %v666
        %1193 = vmatprep.subr.mxu0 %v669
        %1194 = vmatpush1.msra.mxu0 %v668
        %1195 = vmatprep.subr.mxu0 %v671
        %1196 = vmatpush1.msra.mxu0 %v670
        %1197 = vmatprep.subr.mxu0 %v673
        %1198 = vmatpush1.msra.mxu0 %v672
        %1199 = vmatprep.subr.mxu0 %v675
        %1200 = vmatpush1.msra.mxu0 %v674
        %1201 = vmatprep.subr.mxu0 %v677
        %1202 = vmatpush1.msra.mxu0 %v676
        %1203 = vmatprep.subr.mxu0 %v679
        %1204 = vmatpush1.msra.mxu0 %v678
        %1205 = vmatprep.subr.mxu0 %v681
        %1206 = vmatpush1.msra.mxu0 %v680
        %1207 = vmatprep.subr.mxu0 %v683
        %1208 = vmatpush1.msra.mxu0 %v682
        %1209 = vmatprep.subr.mxu0 %v685
        %1210 = vmatpush1.msra.mxu0 %v684
        %1211 = vmatprep.subr.mxu0 %v687
        %1212 = vmatpush1.msra.mxu0 %v686
        %1213 = vmatprep.subr.mxu0 %v689
        %1214 = vmatpush1.msra.mxu0 %v688
        %1215 = vmatprep.subr.mxu0 %v691
        %1216 = vmatpush1.msra.mxu0 %v690
        %1217 = vmatprep.subr.mxu0 %v693
        %1218 = vmatpush1.msra.mxu0 %v692
        %1219 = vmatprep.subr.mxu0 %v695
        %1220 = vmatpush1.msra.mxu0 %v694
        %1221 = vmatprep.subr.mxu0 %v697
        %1222 = vmatpush1.msra.mxu0 %v696
        %1223 = vmatprep.subr.mxu0 %v699
        %1224 = vmatpush1.msra.mxu0 %v698
        %1225 = vmatprep.subr.mxu0 %v701
        %1226 = vmatpush1.msra.mxu0 %v700
        %1227 = vmatprep.subr.mxu0 %v703
        %1228 = vmatpush1.msra.mxu0 %v702
        %1229 = vmatprep.subr.mxu0 %v705
        %1230 = vmatpush1.msra.mxu0 %v704
        %1231 = vmatprep.subr.mxu0 %v707
        %1232 = vmatpush1.msra.mxu0 %v706
        %1233 = vmatprep.subr.mxu0 %v709
        %1234 = vmatpush1.msra.mxu0 %v708
        %1235 = vmatprep.mubr.f32.mxu0 %v329
        %1236 = vmatmul.mubr.f32.gmra.mrb[0].mxu0 %v328
        %v1237 = vpop.f32.mrb[0].mxu0
        %v1238 = vadd.f32 %v789, %v1237
        %v1239 = vpop.f32.mrb[0].mxu0
        %v1240 = vadd.f32 %v791, %v1239
        %1241 = vmatprep.mubr.f32.mxu0 %v333
        %1242 = vmatmul.mubr.f32.gmra.mrb[0].mxu0 %v332
        %v1243 = vpop.f32.mrb[0].mxu0
        %v1244 = vadd.f32 %v795, %v1243
        %v1245 = vpop.f32.mrb[0].mxu0
        %v1246 = vadd.f32 %v797, %v1245
        %1247 = vmatprep.mubr.f32.mxu0 %v337
        %1248 = vmatmul.mubr.f32.gmra.mrb[0].mxu0 %v336
        %v1249 = vpop.f32.mrb[0].mxu0
        %v1250 = vadd.f32 %v801, %v1249
        %v1251 = vpop.f32.mrb[0].mxu0
        %v1252 = vadd.f32 %v803, %v1251
        %1253 = vmatprep.mubr.f32.mxu0 %v341
        %1254 = vmatmul.mubr.f32.gmra.mrb[0].mxu0 %v340
        %v1255 = vpop.f32.mrb[0].mxu0
        %v1256 = vadd.f32 %v807, %v1255
        %v1257 = vpop.f32.mrb[0].mxu0
        %v1258 = vadd.f32 %v809, %v1257
        %1259 = vmatprep.mubr.f32.mxu0 %v345
        %1260 = vmatmul.mubr.f32.gmra.mrb[0].mxu0 %v344
        %v1261 = vpop.f32.mrb[0].mxu0
        %v1262 = vadd.f32 %v813, %v1261
        %v1263 = vpop.f32.mrb[0].mxu0
        %v1264 = vadd.f32 %v815, %v1263
        %1265 = vmatprep.mubr.f32.mxu0 %v349
        %1266 = vmatmul.mubr.f32.gmra.mrb[0].mxu0 %v348
        %v1267 = vpop.f32.mrb[0].mxu0
        %v1268 = vadd.f32 %v819, %v1267
        %v1269 = vpop.f32.mrb[0].mxu0
        %v1270 = vadd.f32 %v821, %v1269
        %1271 = vmatprep.mubr.f32.mxu0 %v353
        %1272 = vmatmul.mubr.f32.gmra.mrb[0].mxu0 %v352
        %v1273 = vpop.f32.mrb[0].mxu0
        %v1274 = vadd.f32 %v825, %v1273
        %v1275 = vpop.f32.mrb[0].mxu0
        %v1276 = vadd.f32 %v827, %v1275
        %1277 = vmatprep.mubr.f32.mxu0 %v357
        %1278 = vmatmul.mubr.f32.gmra.mrb[0].mxu0 %v356
        %v1279 = vpop.f32.mrb[0].mxu0
        %v1280 = vadd.f32 %v831, %v1279
        %v1281 = vpop.f32.mrb[0].mxu0
        %v1282 = vadd.f32 %v833, %v1281
        %1283 = vmatprep.mubr.f32.mxu0 %v361
        %1284 = vmatmul.mubr.f32.gmra.mrb[0].mxu0 %v360
        %v1285 = vpop.f32.mrb[0].mxu0
        %v1286 = vadd.f32 %v837, %v1285
        %v1287 = vpop.f32.mrb[0].mxu0
        %v1288 = vadd.f32 %v839, %v1287
        %1289 = vmatprep.mubr.f32.mxu0 %v365
        %1290 = vmatmul.mubr.f32.gmra.mrb[0].mxu0 %v364
        %v1291 = vpop.f32.mrb[0].mxu0
        %v1292 = vadd.f32 %v843, %v1291
        %v1293 = vpop.f32.mrb[0].mxu0
        %v1294 = vadd.f32 %v845, %v1293
        %1295 = vmatprep.mubr.f32.mxu0 %v369
        %1296 = vmatmul.mubr.f32.gmra.mrb[0].mxu0 %v368
        %v1297 = vpop.f32.mrb[0].mxu0
        %v1298 = vadd.f32 %v849, %v1297
        %v1299 = vpop.f32.mrb[0].mxu0
        %v1300 = vadd.f32 %v851, %v1299
        %1301 = vmatprep.mubr.f32.mxu0 %v373
        %1302 = vmatmul.mubr.f32.gmra.mrb[0].mxu0 %v372
        %v1303 = vpop.f32.mrb[0].mxu0
        %v1304 = vadd.f32 %v855, %v1303
        %v1305 = vpop.f32.mrb[0].mxu0
        %v1306 = vadd.f32 %v857, %v1305
        %1307 = vmatprep.mubr.f32.mxu0 %v377
        %1308 = vmatmul.mubr.f32.gmra.mrb[0].mxu0 %v376
        %v1309 = vpop.f32.mrb[0].mxu0
        %v1310 = vadd.f32 %v861, %v1309
        %v1311 = vpop.f32.mrb[0].mxu0
        %v1312 = vadd.f32 %v863, %v1311
        %1313 = vmatprep.mubr.f32.mxu0 %v381
        %1314 = vmatmul.mubr.f32.gmra.mrb[0].mxu0 %v380
        %v1315 = vpop.f32.mrb[0].mxu0
        %v1316 = vadd.f32 %v867, %v1315
        %v1317 = vpop.f32.mrb[0].mxu0
        %v1318 = vadd.f32 %v869, %v1317
        %1319 = vmatprep.mubr.f32.mxu0 %v385
        %1320 = vmatmul.mubr.f32.gmra.mrb[0].mxu0 %v384
        %v1321 = vpop.f32.mrb[0].mxu0
        %v1322 = vadd.f32 %v873, %v1321
        %v1323 = vpop.f32.mrb[0].mxu0
        %v1324 = vadd.f32 %v875, %v1323
        %1325 = vmatprep.mubr.f32.mxu0 %v389
        %1326 = vmatmul.mubr.f32.gmra.mrb[0].mxu0 %v388
        %v1327 = vpop.f32.mrb[0].mxu0
        %v1328 = vadd.f32 %v879, %v1327
        %v1329 = vpop.f32.mrb[0].mxu0
        %v1330 = vadd.f32 %v881, %v1329
        %1331 = vmatprep.mubr.f32.mxu0 %v393
        %1332 = vmatmul.mubr.f32.gmra.mrb[0].mxu0 %v392
        %v1333 = vpop.f32.mrb[0].mxu0
        %v1334 = vadd.f32 %v885, %v1333
        %v1335 = vpop.f32.mrb[0].mxu0
        %v1336 = vadd.f32 %v887, %v1335
        %1337 = vmatprep.mubr.f32.mxu0 %v397
        %1338 = vmatmul.mubr.f32.gmra.mrb[0].mxu0 %v396
        %v1339 = vpop.f32.mrb[0].mxu0
        %v1340 = vadd.f32 %v891, %v1339
        %v1341 = vpop.f32.mrb[0].mxu0
        %v1342 = vadd.f32 %v893, %v1341
        %1343 = vmatprep.mubr.f32.mxu0 %v401
        %1344 = vmatmul.mubr.f32.gmra.mrb[0].mxu0 %v400
        %v1345 = vpop.f32.mrb[0].mxu0
        %v1346 = vadd.f32 %v897, %v1345
        %v1347 = vpop.f32.mrb[0].mxu0
        %v1348 = vadd.f32 %v899, %v1347
        %1349 = vmatprep.mubr.f32.mxu0 %v405
        %1350 = vmatmul.mubr.f32.gmra.mrb[0].mxu0 %v404
        %v1351 = vpop.f32.mrb[0].mxu0
        %v1352 = vadd.f32 %v903, %v1351
        %v1353 = vpop.f32.mrb[0].mxu0
        %v1354 = vadd.f32 %v905, %v1353
        %1355 = vmatprep.mubr.f32.mxu0 %v409
        %1356 = vmatmul.mubr.f32.gmra.mrb[0].mxu0 %v408
        %v1357 = vpop.f32.mrb[0].mxu0
        %v1358 = vadd.f32 %v909, %v1357
        %v1359 = vpop.f32.mrb[0].mxu0
        %v1360 = vadd.f32 %v911, %v1359
        %1361 = vmatprep.mubr.f32.mxu0 %v413
        %1362 = vmatmul.mubr.f32.gmra.mrb[0].mxu0 %v412
        %v1363 = vpop.f32.mrb[0].mxu0
        %v1364 = vadd.f32 %v915, %v1363
        %v1365 = vpop.f32.mrb[0].mxu0
        %v1366 = vadd.f32 %v917, %v1365
        %1367 = vmatprep.mubr.f32.mxu0 %v417
        %1368 = vmatmul.mubr.f32.gmra.mrb[0].mxu0 %v416
        %v1369 = vpop.f32.mrb[0].mxu0
        %v1370 = vadd.f32 %v921, %v1369
        %v1371 = vpop.f32.mrb[0].mxu0
        %v1372 = vadd.f32 %v923, %v1371
        %1373 = vmatprep.mubr.f32.mxu0 %v421
        %1374 = vmatmul.mubr.f32.gmra.mrb[0].mxu0 %v420
        %v1375 = vpop.f32.mrb[0].mxu0
        %v1376 = vadd.f32 %v927, %v1375
        %v1377 = vpop.f32.mrb[0].mxu0
        %v1378 = vadd.f32 %v929, %v1377
        %1379 = vmatprep.mubr.f32.mxu0 %v425
        %1380 = vmatmul.mubr.f32.gmra.mrb[0].mxu0 %v424
        %v1381 = vpop.f32.mrb[0].mxu0
        %v1382 = vadd.f32 %v933, %v1381
        %v1383 = vpop.f32.mrb[0].mxu0
        %v1384 = vadd.f32 %v935, %v1383
        %1385 = vmatprep.mubr.f32.mxu0 %v429
        %1386 = vmatmul.mubr.f32.gmra.mrb[0].mxu0 %v428
        %v1387 = vpop.f32.mrb[0].mxu0
        %v1388 = vadd.f32 %v939, %v1387
        %v1389 = vpop.f32.mrb[0].mxu0
        %v1390 = vadd.f32 %v941, %v1389
        %1391 = vmatprep.mubr.f32.mxu0 %v433
        %1392 = vmatmul.mubr.f32.gmra.mrb[0].mxu0 %v432
        %v1393 = vpop.f32.mrb[0].mxu0
        %v1394 = vadd.f32 %v945, %v1393
        %v1395 = vpop.f32.mrb[0].mxu0
        %v1396 = vadd.f32 %v947, %v1395
        %1397 = vmatprep.mubr.f32.mxu0 %v437
        %1398 = vmatmul.mubr.f32.gmra.mrb[0].mxu0 %v436
        %v1399 = vpop.f32.mrb[0].mxu0
        %v1400 = vadd.f32 %v951, %v1399
        %v1401 = vpop.f32.mrb[0].mxu0
        %v1402 = vadd.f32 %v953, %v1401
        %1403 = vmatprep.mubr.f32.mxu0 %v441
        %1404 = vmatmul.mubr.f32.gmra.mrb[0].mxu0 %v440
        %v1405 = vpop.f32.mrb[0].mxu0
        %v1406 = vadd.f32 %v957, %v1405
        %v1407 = vpop.f32.mrb[0].mxu0
        %v1408 = vadd.f32 %v959, %v1407
        %1409 = vmatprep.mubr.f32.mxu0 %v445
        %1410 = vmatmul.mubr.f32.gmra.mrb[0].mxu0 %v444
        %v1411 = vpop.f32.mrb[0].mxu0
        %v1412 = vadd.f32 %v963, %v1411
        %v1413 = vpop.f32.mrb[0].mxu0
        %v1414 = vadd.f32 %v965, %v1413
        %1415 = vmatprep.mubr.f32.mxu0 %v449
        %1416 = vmatmul.mubr.f32.gmra.mrb[0].mxu0 %v448
        %v1417 = vpop.f32.mrb[0].mxu0
        %v1418 = vadd.f32 %v969, %v1417
        %v1419 = vpop.f32.mrb[0].mxu0
        %v1420 = vadd.f32 %v971, %v1419
        %1421 = vmatprep.mubr.f32.mxu0 %v453
        %1422 = vmatmul.mubr.f32.gmra.mrb[0].mxu0 %v452
        %v1423 = vpop.f32.mrb[0].mxu0
        %v1424 = vadd.f32 %v975, %v1423
        %v1425 = vpop.f32.mrb[0].mxu0
        %v1426 = vadd.f32 %v977, %v1425
        %1427 = vmatprep.mubr.f32.mxu0 %v457
        %1428 = vmatmul.mubr.f32.gmra.mrb[0].mxu0 %v456
        %v1429 = vpop.f32.mrb[0].mxu0
        %v1430 = vadd.f32 %v981, %v1429
        %v1431 = vpop.f32.mrb[0].mxu0
        %v1432 = vadd.f32 %v983, %v1431
        %1433 = vmatprep.mubr.f32.mxu0 %v461
        %1434 = vmatmul.mubr.f32.gmra.mrb[0].mxu0 %v460
        %v1435 = vpop.f32.mrb[0].mxu0
        %v1436 = vadd.f32 %v987, %v1435
        %v1437 = vpop.f32.mrb[0].mxu0
        %v1438 = vadd.f32 %v989, %v1437
        %1439 = vmatprep.mubr.f32.mxu0 %v465
        %1440 = vmatmul.mubr.f32.gmra.mrb[0].mxu0 %v464
        %v1441 = vpop.f32.mrb[0].mxu0
        %v1442 = vadd.f32 %v993, %v1441
        %v1443 = vpop.f32.mrb[0].mxu0
        %v1444 = vadd.f32 %v995, %v1443
        %1445 = vmatprep.mubr.f32.mxu0 %v469
        %1446 = vmatmul.mubr.f32.gmra.mrb[0].mxu0 %v468
        %v1447 = vpop.f32.mrb[0].mxu0
        %v1448 = vadd.f32 %v999, %v1447
        %v1449 = vpop.f32.mrb[0].mxu0
        %v1450 = vadd.f32 %v1001, %v1449
        %1451 = vmatprep.mubr.f32.mxu0 %v473
        %1452 = vmatmul.mubr.f32.gmra.mrb[0].mxu0 %v472
        %v1453 = vpop.f32.mrb[0].mxu0
        %v1454 = vadd.f32 %v1005, %v1453
        %v1455 = vpop.f32.mrb[0].mxu0
        %v1456 = vadd.f32 %v1007, %v1455
        %1457 = vmatprep.mubr.f32.mxu0 %v477
        %1458 = vmatmul.mubr.f32.gmra.mrb[0].mxu0 %v476
        %v1459 = vpop.f32.mrb[0].mxu0
        %v1460 = vadd.f32 %v1011, %v1459
        %v1461 = vpop.f32.mrb[0].mxu0
        %v1462 = vadd.f32 %v1013, %v1461
        %1463 = vmatprep.mubr.f32.mxu0 %v481
        %1464 = vmatmul.mubr.f32.gmra.mrb[0].mxu0 %v480
        %v1465 = vpop.f32.mrb[0].mxu0
        %v1466 = vadd.f32 %v1017, %v1465
        %v1467 = vpop.f32.mrb[0].mxu0
        %v1468 = vadd.f32 %v1019, %v1467
        %1469 = vmatprep.mubr.f32.mxu0 %v485
        %1470 = vmatmul.mubr.f32.gmra.mrb[0].mxu0 %v484
        %v1471 = vpop.f32.mrb[0].mxu0
        %v1472 = vadd.f32 %v1023, %v1471
        %v1473 = vpop.f32.mrb[0].mxu0
        %v1474 = vadd.f32 %v1025, %v1473
        %1475 = vmatprep.mubr.f32.mxu0 %v489
        %1476 = vmatmul.mubr.f32.gmra.mrb[0].mxu0 %v488
        %v1477 = vpop.f32.mrb[0].mxu0
        %v1478 = vadd.f32 %v1029, %v1477
        %v1479 = vpop.f32.mrb[0].mxu0
        %v1480 = vadd.f32 %v1031, %v1479
        %1481 = vmatprep.mubr.f32.mxu0 %v493
        %1482 = vmatmul.mubr.f32.gmra.mrb[0].mxu0 %v492
        %v1483 = vpop.f32.mrb[0].mxu0
        %v1484 = vadd.f32 %v1035, %v1483
        %v1485 = vpop.f32.mrb[0].mxu0
        %v1486 = vadd.f32 %v1037, %v1485
        %1487 = vmatprep.mubr.f32.mxu0 %v497
        %1488 = vmatmul.mubr.f32.gmra.mrb[0].mxu0 %v496
        %v1489 = vpop.f32.mrb[0].mxu0
        %v1490 = vadd.f32 %v1041, %v1489
        %v1491 = vpop.f32.mrb[0].mxu0
        %v1492 = vadd.f32 %v1043, %v1491
        %1493 = vmatprep.mubr.f32.mxu0 %v501
        %1494 = vmatmul.mubr.f32.gmra.mrb[0].mxu0 %v500
        %v1495 = vpop.f32.mrb[0].mxu0
        %v1496 = vadd.f32 %v1047, %v1495
        %v1497 = vpop.f32.mrb[0].mxu0
        %v1498 = vadd.f32 %v1049, %v1497
        %1499 = vmatprep.mubr.f32.mxu0 %v505
        %1500 = vmatmul.mubr.f32.gmra.mrb[0].mxu0 %v504
        %v1501 = vpop.f32.mrb[0].mxu0
        %v1502 = vadd.f32 %v1053, %v1501
        %v1503 = vpop.f32.mrb[0].mxu0
        %v1504 = vadd.f32 %v1055, %v1503
        %1505 = vmatprep.mubr.f32.mxu0 %v509
        %1506 = vmatmul.mubr.f32.gmra.mrb[0].mxu0 %v508
        %v1507 = vpop.f32.mrb[0].mxu0
        %v1508 = vadd.f32 %v1059, %v1507
        %v1509 = vpop.f32.mrb[0].mxu0
        %v1510 = vadd.f32 %v1061, %v1509
        %1511 = vmatprep.mubr.f32.mxu0 %v513
        %1512 = vmatmul.mubr.f32.gmra.mrb[0].mxu0 %v512
        %v1513 = vpop.f32.mrb[0].mxu0
        %v1514 = vadd.f32 %v1065, %v1513
        %v1515 = vpop.f32.mrb[0].mxu0
        %v1516 = vadd.f32 %v1067, %v1515
        %1517 = vmatprep.mubr.f32.mxu0 %v517
        %1518 = vmatmul.mubr.f32.gmra.mrb[0].mxu0 %v516
        %v1519 = vpop.f32.mrb[0].mxu0
        %v1520 = vadd.f32 %v1071, %v1519
        %v1521 = vpop.f32.mrb[0].mxu0
        %v1522 = vadd.f32 %v1073, %v1521
        %1523 = vmatprep.mubr.f32.mxu0 %v521
        %1524 = vmatmul.mubr.f32.gmra.mrb[0].mxu0 %v520
        %v1525 = vpop.f32.mrb[0].mxu0
        %v1526 = vadd.f32 %v1077, %v1525
        %v1527 = vpop.f32.mrb[0].mxu0
        %v1528 = vadd.f32 %v1079, %v1527
        %1529 = vmatprep.mubr.f32.mxu0 %v525
        %1530 = vmatmul.mubr.f32.gmra.mrb[0].mxu0 %v524
        %v1531 = vpop.f32.mrb[0].mxu0
        %v1532 = vadd.f32 %v1083, %v1531
        %v1533 = vpop.f32.mrb[0].mxu0
        %v1534 = vadd.f32 %v1085, %v1533
        %1535 = vmatprep.mubr.f32.mxu0 %v529
        %1536 = vmatmul.mubr.f32.gmra.mrb[0].mxu0 %v528
        %v1537 = vpop.f32.mrb[0].mxu0
        %v1538 = vadd.f32 %v1089, %v1537
        %v1539 = vpop.f32.mrb[0].mxu0
        %v1540 = vadd.f32 %v1091, %v1539
        %1541 = vmatprep.mubr.f32.mxu0 %v533
        %1542 = vmatmul.mubr.f32.gmra.mrb[0].mxu0 %v532
        %v1543 = vpop.f32.mrb[0].mxu0
        %v1544 = vadd.f32 %v1095, %v1543
        %v1545 = vpop.f32.mrb[0].mxu0
        %v1546 = vadd.f32 %v1097, %v1545
        %1547 = vmatprep.mubr.f32.mxu0 %v537
        %1548 = vmatmul.mubr.f32.gmra.mrb[0].mxu0 %v536
        %v1549 = vpop.f32.mrb[0].mxu0
        %v1550 = vadd.f32 %v1101, %v1549
        %v1551 = vpop.f32.mrb[0].mxu0
        %v1552 = vadd.f32 %v1103, %v1551
        %1553 = vmatprep.mubr.f32.mxu0 %v541
        %1554 = vmatmul.mubr.f32.gmra.mrb[0].mxu0 %v540
        %v1555 = vpop.f32.mrb[0].mxu0
        %v1556 = vadd.f32 %v1107, %v1555
        %v1557 = vpop.f32.mrb[0].mxu0
        %v1558 = vadd.f32 %v1109, %v1557
        %1559 = vmatprep.mubr.f32.mxu0 %v545
        %1560 = vmatmul.mubr.f32.gmra.mrb[0].mxu0 %v544
        %v1561 = vpop.f32.mrb[0].mxu0
        %v1562 = vadd.f32 %v1113, %v1561
        %v1563 = vpop.f32.mrb[0].mxu0
        %v1564 = vadd.f32 %v1115, %v1563
        %1565 = vmatprep.mubr.f32.mxu0 %v549
        %1566 = vmatmul.mubr.f32.gmra.mrb[0].mxu0 %v548
        %v1567 = vpop.f32.mrb[0].mxu0
        %v1568 = vadd.f32 %v1119, %v1567
        %v1569 = vpop.f32.mrb[0].mxu0
        %v1570 = vadd.f32 %v1121, %v1569
        %1571 = vmatprep.mubr.f32.mxu0 %v553
        %1572 = vmatmul.mubr.f32.gmra.mrb[0].mxu0 %v552
        %v1573 = vpop.f32.mrb[0].mxu0
        %v1574 = vadd.f32 %v1125, %v1573
        %v1575 = vpop.f32.mrb[0].mxu0
        %v1576 = vadd.f32 %v1127, %v1575
        %1577 = vmatprep.mubr.f32.mxu0 %v557
        %1578 = vmatmul.mubr.f32.gmra.mrb[0].mxu0 %v556
        %v1579 = vpop.f32.mrb[0].mxu0
        %v1580 = vadd.f32 %v1131, %v1579
        %v1581 = vpop.f32.mrb[0].mxu0
        %v1582 = vadd.f32 %v1133, %v1581
        %1583 = vmatprep.mubr.f32.mxu0 %v561
        %1584 = vmatmul.mubr.f32.gmra.mrb[0].mxu0 %v560
        %v1585 = vpop.f32.mrb[0].mxu0
        %v1586 = vadd.f32 %v1137, %v1585
        %v1587 = vpop.f32.mrb[0].mxu0
        %v1588 = vadd.f32 %v1139, %v1587
        %1589 = vmatprep.mubr.f32.mxu0 %v565
        %1590 = vmatmul.mubr.f32.gmra.mrb[0].mxu0 %v564
        %v1591 = vpop.f32.mrb[0].mxu0
        %v1592 = vadd.f32 %v1143, %v1591
        %v1593 = vpop.f32.mrb[0].mxu0
        %v1594 = vadd.f32 %v1145, %v1593
        %1595 = vmatprep.mubr.f32.mxu0 %v569
        %1596 = vmatmul.mubr.f32.gmra.mrb[0].mxu0 %v568
        %v1597 = vpop.f32.mrb[0].mxu0
        %v1598 = vadd.f32 %v1149, %v1597
        %v1599 = vpop.f32.mrb[0].mxu0
        %v1600 = vadd.f32 %v1151, %v1599
        %1601 = vmatprep.mubr.f32.mxu0 %v573
        %1602 = vmatmul.mubr.f32.gmra.mrb[0].mxu0 %v572
        %v1603 = vpop.f32.mrb[0].mxu0
        %v1604 = vadd.f32 %v1155, %v1603
        %v1605 = vpop.f32.mrb[0].mxu0
        %v1606 = vadd.f32 %v1157, %v1605
        %1607 = vmatprep.mubr.f32.mxu0 %v577
        %1608 = vmatmul.mubr.f32.gmra.mrb[0].mxu0 %v576
        %v1609 = vpop.f32.mrb[0].mxu0
        %v1610 = vadd.f32 %v1161, %v1609
        %v1611 = vpop.f32.mrb[0].mxu0
        %v1612 = vadd.f32 %v1163, %v1611
        %1613 = vmatprep.mubr.f32.mxu0 %v581
        %1614 = vmatmul.mubr.f32.gmra.mrb[0].mxu0 %v580
        %v1615 = vpop.f32.mrb[0].mxu0
        %v1616 = vadd.f32 %v1167, %v1615
        %v1617 = vpop.f32.mrb[0].mxu0
        %v1618 = vadd.f32 %v1169, %v1617
        %1619 = vdwg.mxu0
        %v1620 = vtanh.pop %v1238
        %v1621 = vtanh.pop %v1244
        %v1622 = vtanh.pop %v1250
        %v1623 = vtanh.pop %v1256
        %v1624 = vtanh.pop %v1262
        %v1625 = vtanh.pop %v1268
        %v1626 = vtanh.pop %v1274
        %v1627 = vtanh.pop %v1280
        %v1628 = vtanh.pop %v1286
        %v1629 = vtanh.pop %v1292
        %v1630 = vtanh.pop %v1298
        %v1631 = vtanh.pop %v1304
        %v1632 = vtanh.pop %v1310
        %v1633 = vtanh.pop %v1316
        %v1634 = vtanh.pop %v1322
        %v1635 = vtanh.pop %v1328
        %v1636 = vtanh.pop %v1334
        %v1637 = vtanh.pop %v1340
        %v1638 = vtanh.pop %v1346
        %v1639 = vtanh.pop %v1352
        %v1640 = vtanh.pop %v1358
        %v1641 = vtanh.pop %v1364
        %v1642 = vtanh.pop %v1370
        %v1643 = vtanh.pop %v1376
        %v1644 = vtanh.pop %v1382
        %v1645 = vtanh.pop %v1388
        %v1646 = vtanh.pop %v1394
        %v1647 = vtanh.pop %v1400
        %v1648 = vtanh.pop %v1406
        %v1649 = vtanh.pop %v1412
        %v1650 = vtanh.pop %v1418
        %v1651 = vtanh.pop %v1424
        %v1652 = vtanh.pop %v1430
        %v1653 = vtanh.pop %v1436
        %v1654 = vtanh.pop %v1442
        %v1655 = vtanh.pop %v1448
        %v1656 = vtanh.pop %v1454
        %v1657 = vtanh.pop %v1460
        %v1658 = vtanh.pop %v1466
        %v1659 = vtanh.pop %v1472
        %v1660 = vtanh.pop %v1478
        %v1661 = vtanh.pop %v1484
        %v1662 = vtanh.pop %v1490
        %v1663 = vtanh.pop %v1496
        %v1664 = vtanh.pop %v1502
        %v1665 = vtanh.pop %v1508
        %v1666 = vtanh.pop %v1514
        %v1667 = vtanh.pop %v1520
        %v1668 = vtanh.pop %v1526
        %v1669 = vtanh.pop %v1532
        %v1670 = vtanh.pop %v1538
        %v1671 = vtanh.pop %v1544
        %v1672 = vtanh.pop %v1550
        %v1673 = vtanh.pop %v1556
        %v1674 = vtanh.pop %v1562
        %v1675 = vtanh.pop %v1568
        %v1676 = vtanh.pop %v1574
        %v1677 = vtanh.pop %v1580
        %v1678 = vtanh.pop %v1586
        %v1679 = vtanh.pop %v1592
        %v1680 = vtanh.pop %v1598
        %v1681 = vtanh.pop %v1604
        %v1682 = vtanh.pop %v1610
        %v1683 = vtanh.pop %v1616
        %v1684 = vmul.f32 %v1240, 0.5
        %v1685 = vmul.f32 %v1246, 0.5
        %v1686 = vmul.f32 %v1252, 0.5
        %v1687 = vmul.f32 %v1258, 0.5
        %v1688 = vmul.f32 %v1264, 0.5
        %v1689 = vmul.f32 %v1270, 0.5
        %v1690 = vmul.f32 %v1276, 0.5
        %v1691 = vmul.f32 %v1282, 0.5
        %v1692 = vmul.f32 %v1288, 0.5
        %v1693 = vmul.f32 %v1294, 0.5
        %v1694 = vmul.f32 %v1300, 0.5
        %v1695 = vmul.f32 %v1306, 0.5
        %v1696 = vmul.f32 %v1312, 0.5
        %v1697 = vmul.f32 %v1318, 0.5
        %v1698 = vmul.f32 %v1324, 0.5
        %v1699 = vmul.f32 %v1330, 0.5
        %v1700 = vmul.f32 %v1336, 0.5
        %v1701 = vmul.f32 %v1342, 0.5
        %v1702 = vmul.f32 %v1348, 0.5
        %v1703 = vmul.f32 %v1354, 0.5
        %v1704 = vmul.f32 %v1360, 0.5
        %v1705 = vmul.f32 %v1366, 0.5
        %v1706 = vmul.f32 %v1372, 0.5
        %v1707 = vmul.f32 %v1378, 0.5
        %v1708 = vmul.f32 %v1384, 0.5
        %v1709 = vmul.f32 %v1390, 0.5
        %v1710 = vmul.f32 %v1396, 0.5
        %v1711 = vmul.f32 %v1402, 0.5
        %v1712 = vmul.f32 %v1408, 0.5
        %v1713 = vmul.f32 %v1414, 0.5
        %v1714 = vmul.f32 %v1420, 0.5
        %v1715 = vmul.f32 %v1426, 0.5
        %v1716 = vmul.f32 %v1432, 0.5
        %v1717 = vmul.f32 %v1438, 0.5
        %v1718 = vmul.f32 %v1444, 0.5
        %v1719 = vmul.f32 %v1450, 0.5
        %v1720 = vmul.f32 %v1456, 0.5
        %v1721 = vmul.f32 %v1462, 0.5
        %v1722 = vmul.f32 %v1468, 0.5
        %v1723 = vmul.f32 %v1474, 0.5
        %v1724 = vmul.f32 %v1480, 0.5
        %v1725 = vmul.f32 %v1486, 0.5
        %v1726 = vmul.f32 %v1492, 0.5
        %v1727 = vmul.f32 %v1498, 0.5
        %v1728 = vmul.f32 %v1504, 0.5
        %v1729 = vmul.f32 %v1510, 0.5
        %v1730 = vmul.f32 %v1516, 0.5
        %v1731 = vmul.f32 %v1522, 0.5
        %v1732 = vmul.f32 %v1528, 0.5
        %v1733 = vmul.f32 %v1534, 0.5
        %v1734 = vmul.f32 %v1540, 0.5
        %v1735 = vmul.f32 %v1546, 0.5
        %v1736 = vmul.f32 %v1552, 0.5
        %v1737 = vmul.f32 %v1558, 0.5
        %v1738 = vmul.f32 %v1564, 0.5
        %v1739 = vmul.f32 %v1570, 0.5
        %v1740 = vmul.f32 %v1576, 0.5
        %v1741 = vmul.f32 %v1582, 0.5
        %v1742 = vmul.f32 %v1588, 0.5
        %v1743 = vmul.f32 %v1594, 0.5
        %v1744 = vmul.f32 %v1600, 0.5
        %v1745 = vmul.f32 %v1606, 0.5
        %v1746 = vmul.f32 %v1612, 0.5
        %v1747 = vmul.f32 %v1618, 0.5
        %v1748 = vtanh.pop %v1684
        %v1749 = vtanh.pop %v1685
        %v1750 = vtanh.pop %v1686
        %v1751 = vtanh.pop %v1687
        %v1752 = vtanh.pop %v1688
        %v1753 = vtanh.pop %v1689
        %v1754 = vtanh.pop %v1690
        %v1755 = vtanh.pop %v1691
        %v1756 = vtanh.pop %v1692
        %v1757 = vtanh.pop %v1693
        %v1758 = vtanh.pop %v1694
        %v1759 = vtanh.pop %v1695
        %v1760 = vtanh.pop %v1696
        %v1761 = vtanh.pop %v1697
        %v1762 = vtanh.pop %v1698
        %v1763 = vtanh.pop %v1699
        %v1764 = vtanh.pop %v1700
        %v1765 = vtanh.pop %v1701
        %v1766 = vtanh.pop %v1702
        %v1767 = vtanh.pop %v1703
        %v1768 = vtanh.pop %v1704
        %v1769 = vtanh.pop %v1705
        %v1770 = vtanh.pop %v1706
        %v1771 = vtanh.pop %v1707
        %v1772 = vtanh.pop %v1708
        %v1773 = vtanh.pop %v1709
        %v1774 = vtanh.pop %v1710
        %v1775 = vtanh.pop %v1711
        %v1776 = vtanh.pop %v1712
        %v1777 = vtanh.pop %v1713
        %v1778 = vtanh.pop %v1714
        %v1779 = vtanh.pop %v1715
        %v1780 = vtanh.pop %v1716
        %v1781 = vtanh.pop %v1717
        %v1782 = vtanh.pop %v1718
        %v1783 = vtanh.pop %v1719
        %v1784 = vtanh.pop %v1720
        %v1785 = vtanh.pop %v1721
        %v1786 = vtanh.pop %v1722
        %v1787 = vtanh.pop %v1723
        %v1788 = vtanh.pop %v1724
        %v1789 = vtanh.pop %v1725
        %v1790 = vtanh.pop %v1726
        %v1791 = vtanh.pop %v1727
        %v1792 = vtanh.pop %v1728
        %v1793 = vtanh.pop %v1729
        %v1794 = vtanh.pop %v1730
        %v1795 = vtanh.pop %v1731
        %v1796 = vtanh.pop %v1732
        %v1797 = vtanh.pop %v1733
        %v1798 = vtanh.pop %v1734
        %v1799 = vtanh.pop %v1735
        %v1800 = vtanh.pop %v1736
        %v1801 = vtanh.pop %v1737
        %v1802 = vtanh.pop %v1738
        %v1803 = vtanh.pop %v1739
        %v1804 = vtanh.pop %v1740
        %v1805 = vtanh.pop %v1741
        %v1806 = vtanh.pop %v1742
        %v1807 = vtanh.pop %v1743
        %v1808 = vtanh.pop %v1744
        %v1809 = vtanh.pop %v1745
        %v1810 = vtanh.pop %v1746
        %v1811 = vtanh.pop %v1747
        %v1812 = vadd.f32 %v1748, 1.0
        %v1813 = vadd.f32 %v1749, 1.0
        %v1814 = vadd.f32 %v1750, 1.0
        %v1815 = vadd.f32 %v1751, 1.0
        %v1816 = vadd.f32 %v1752, 1.0
        %v1817 = vadd.f32 %v1753, 1.0
        %v1818 = vadd.f32 %v1754, 1.0
        %v1819 = vadd.f32 %v1755, 1.0
        %v1820 = vadd.f32 %v1756, 1.0
        %v1821 = vadd.f32 %v1757, 1.0
        %v1822 = vadd.f32 %v1758, 1.0
        %v1823 = vadd.f32 %v1759, 1.0
        %v1824 = vadd.f32 %v1760, 1.0
        %v1825 = vadd.f32 %v1761, 1.0
        %v1826 = vadd.f32 %v1762, 1.0
        %v1827 = vadd.f32 %v1763, 1.0
        %v1828 = vadd.f32 %v1764, 1.0
        %v1829 = vadd.f32 %v1765, 1.0
        %v1830 = vadd.f32 %v1766, 1.0
        %v1831 = vadd.f32 %v1767, 1.0
        %v1832 = vadd.f32 %v1768, 1.0
        %v1833 = vadd.f32 %v1769, 1.0
        %v1834 = vadd.f32 %v1770, 1.0
        %v1835 = vadd.f32 %v1771, 1.0
        %v1836 = vadd.f32 %v1772, 1.0
        %v1837 = vadd.f32 %v1773, 1.0
        %v1838 = vadd.f32 %v1774, 1.0
        %v1839 = vadd.f32 %v1775, 1.0
        %v1840 = vadd.f32 %v1776, 1.0
        %v1841 = vadd.f32 %v1777, 1.0
        %v1842 = vadd.f32 %v1778, 1.0
        %v1843 = vadd.f32 %v1779, 1.0
        %v1844 = vadd.f32 %v1780, 1.0
        %v1845 = vadd.f32 %v1781, 1.0
        %v1846 = vadd.f32 %v1782, 1.0
        %v1847 = vadd.f32 %v1783, 1.0
        %v1848 = vadd.f32 %v1784, 1.0
        %v1849 = vadd.f32 %v1785, 1.0
        %v1850 = vadd.f32 %v1786, 1.0
        %v1851 = vadd.f32 %v1787, 1.0
        %v1852 = vadd.f32 %v1788, 1.0
        %v1853 = vadd.f32 %v1789, 1.0
        %v1854 = vadd.f32 %v1790, 1.0
        %v1855 = vadd.f32 %v1791, 1.0
        %v1856 = vadd.f32 %v1792, 1.0
        %v1857 = vadd.f32 %v1793, 1.0
        %v1858 = vadd.f32 %v1794, 1.0
        %v1859 = vadd.f32 %v1795, 1.0
        %v1860 = vadd.f32 %v1796, 1.0
        %v1861 = vadd.f32 %v1797, 1.0
        %v1862 = vadd.f32 %v1798, 1.0
        %v1863 = vadd.f32 %v1799, 1.0
        %v1864 = vadd.f32 %v1800, 1.0
        %v1865 = vadd.f32 %v1801, 1.0
        %v1866 = vadd.f32 %v1802, 1.0
        %v1867 = vadd.f32 %v1803, 1.0
        %v1868 = vadd.f32 %v1804, 1.0
        %v1869 = vadd.f32 %v1805, 1.0
        %v1870 = vadd.f32 %v1806, 1.0
        %v1871 = vadd.f32 %v1807, 1.0
        %v1872 = vadd.f32 %v1808, 1.0
        %v1873 = vadd.f32 %v1809, 1.0
        %v1874 = vadd.f32 %v1810, 1.0
        %v1875 = vadd.f32 %v1811, 1.0
        %v1876 = vmul.f32 %v1812, 0.5
        %v1877 = vmul.f32 %v1813, 0.5
        %v1878 = vmul.f32 %v1814, 0.5
        %v1879 = vmul.f32 %v1815, 0.5
        %v1880 = vmul.f32 %v1816, 0.5
        %v1881 = vmul.f32 %v1817, 0.5
        %v1882 = vmul.f32 %v1818, 0.5
        %v1883 = vmul.f32 %v1819, 0.5
        %v1884 = vmul.f32 %v1820, 0.5
        %v1885 = vmul.f32 %v1821, 0.5
        %v1886 = vmul.f32 %v1822, 0.5
        %v1887 = vmul.f32 %v1823, 0.5
        %v1888 = vmul.f32 %v1824, 0.5
        %v1889 = vmul.f32 %v1825, 0.5
        %v1890 = vmul.f32 %v1826, 0.5
        %v1891 = vmul.f32 %v1827, 0.5
        %v1892 = vmul.f32 %v1828, 0.5
        %v1893 = vmul.f32 %v1829, 0.5
        %v1894 = vmul.f32 %v1830, 0.5
        %v1895 = vmul.f32 %v1831, 0.5
        %v1896 = vmul.f32 %v1832, 0.5
        %v1897 = vmul.f32 %v1833, 0.5
        %v1898 = vmul.f32 %v1834, 0.5
        %v1899 = vmul.f32 %v1835, 0.5
        %v1900 = vmul.f32 %v1836, 0.5
        %v1901 = vmul.f32 %v1837, 0.5
        %v1902 = vmul.f32 %v1838, 0.5
        %v1903 = vmul.f32 %v1839, 0.5
        %v1904 = vmul.f32 %v1840, 0.5
        %v1905 = vmul.f32 %v1841, 0.5
        %v1906 = vmul.f32 %v1842, 0.5
        %v1907 = vmul.f32 %v1843, 0.5
        %v1908 = vmul.f32 %v1844, 0.5
        %v1909 = vmul.f32 %v1845, 0.5
        %v1910 = vmul.f32 %v1846, 0.5
        %v1911 = vmul.f32 %v1847, 0.5
        %v1912 = vmul.f32 %v1848, 0.5
        %v1913 = vmul.f32 %v1849, 0.5
        %v1914 = vmul.f32 %v1850, 0.5
        %v1915 = vmul.f32 %v1851, 0.5
        %v1916 = vmul.f32 %v1852, 0.5
        %v1917 = vmul.f32 %v1853, 0.5
        %v1918 = vmul.f32 %v1854, 0.5
        %v1919 = vmul.f32 %v1855, 0.5
        %v1920 = vmul.f32 %v1856, 0.5
        %v1921 = vmul.f32 %v1857, 0.5
        %v1922 = vmul.f32 %v1858, 0.5
        %v1923 = vmul.f32 %v1859, 0.5
        %v1924 = vmul.f32 %v1860, 0.5
        %v1925 = vmul.f32 %v1861, 0.5
        %v1926 = vmul.f32 %v1862, 0.5
        %v1927 = vmul.f32 %v1863, 0.5
        %v1928 = vmul.f32 %v1864, 0.5
        %v1929 = vmul.f32 %v1865, 0.5
        %v1930 = vmul.f32 %v1866, 0.5
        %v1931 = vmul.f32 %v1867, 0.5
        %v1932 = vmul.f32 %v1868, 0.5
        %v1933 = vmul.f32 %v1869, 0.5
        %v1934 = vmul.f32 %v1870, 0.5
        %v1935 = vmul.f32 %v1871, 0.5
        %v1936 = vmul.f32 %v1872, 0.5
        %v1937 = vmul.f32 %v1873, 0.5
        %v1938 = vmul.f32 %v1874, 0.5
        %v1939 = vmul.f32 %v1875, 0.5
        %v1940 = vmul.f32 %v1620, %v1876
        %v1941 = vmul.f32 %v1621, %v1877
        %v1942 = vmul.f32 %v1622, %v1878
        %v1943 = vmul.f32 %v1623, %v1879
        %v1944 = vmul.f32 %v1624, %v1880
        %v1945 = vmul.f32 %v1625, %v1881
        %v1946 = vmul.f32 %v1626, %v1882
        %v1947 = vmul.f32 %v1627, %v1883
        %v1948 = vmul.f32 %v1628, %v1884
        %v1949 = vmul.f32 %v1629, %v1885
        %v1950 = vmul.f32 %v1630, %v1886
        %v1951 = vmul.f32 %v1631, %v1887
        %v1952 = vmul.f32 %v1632, %v1888
        %v1953 = vmul.f32 %v1633, %v1889
        %v1954 = vmul.f32 %v1634, %v1890
        %v1955 = vmul.f32 %v1635, %v1891
        %v1956 = vmul.f32 %v1636, %v1892
        %v1957 = vmul.f32 %v1637, %v1893
        %v1958 = vmul.f32 %v1638, %v1894
        %v1959 = vmul.f32 %v1639, %v1895
        %v1960 = vmul.f32 %v1640, %v1896
        %v1961 = vmul.f32 %v1641, %v1897
        %v1962 = vmul.f32 %v1642, %v1898
        %v1963 = vmul.f32 %v1643, %v1899
        %v1964 = vmul.f32 %v1644, %v1900
        %v1965 = vmul.f32 %v1645, %v1901
        %v1966 = vmul.f32 %v1646, %v1902
        %v1967 = vmul.f32 %v1647, %v1903
        %v1968 = vmul.f32 %v1648, %v1904
        %v1969 = vmul.f32 %v1649, %v1905
        %v1970 = vmul.f32 %v1650, %v1906
        %v1971 = vmul.f32 %v1651, %v1907
        %v1972 = vmul.f32 %v1652, %v1908
        %v1973 = vmul.f32 %v1653, %v1909
        %v1974 = vmul.f32 %v1654, %v1910
        %v1975 = vmul.f32 %v1655, %v1911
        %v1976 = vmul.f32 %v1656, %v1912
        %v1977 = vmul.f32 %v1657, %v1913
        %v1978 = vmul.f32 %v1658, %v1914
        %v1979 = vmul.f32 %v1659, %v1915
        %v1980 = vmul.f32 %v1660, %v1916
        %v1981 = vmul.f32 %v1661, %v1917
        %v1982 = vmul.f32 %v1662, %v1918
        %v1983 = vmul.f32 %v1663, %v1919
        %v1984 = vmul.f32 %v1664, %v1920
        %v1985 = vmul.f32 %v1665, %v1921
        %v1986 = vmul.f32 %v1666, %v1922
        %v1987 = vmul.f32 %v1667, %v1923
        %v1988 = vmul.f32 %v1668, %v1924
        %v1989 = vmul.f32 %v1669, %v1925
        %v1990 = vmul.f32 %v1670, %v1926
        %v1991 = vmul.f32 %v1671, %v1927
        %v1992 = vmul.f32 %v1672, %v1928
        %v1993 = vmul.f32 %v1673, %v1929
        %v1994 = vmul.f32 %v1674, %v1930
        %v1995 = vmul.f32 %v1675, %v1931
        %v1996 = vmul.f32 %v1676, %v1932
        %v1997 = vmul.f32 %v1677, %v1933
        %v1998 = vmul.f32 %v1678, %v1934
        %v1999 = vmul.f32 %v1679, %v1935
        %v2000 = vmul.f32 %v1680, %v1936
        %v2001 = vmul.f32 %v1681, %v1937
        %v2002 = vmul.f32 %v1682, %v1938
        %v2003 = vmul.f32 %v1683, %v1939
        %v2004 = vld [vmem:[#allocation11] sm:$0x1]
        %v2005 = vld [vmem:[#allocation4] sm:$0x1]
        %2007 = vset.pattern.permute.xlu0 0
        %2008 = vperm.xlu0 %2007, %v2005
        %v2009 = vpop.permute.xlu0 %2008
        %v2011 = vlaneseq
        %v2012 = vshrl.u32 %v2011, 7
        %v2013 = vsub.s32 0, %v2012
        %v2014 = vrot.slane %v2009, %v2013
        %2015 = vmatprep.subr.mxu0 0.0
        %2016 = vmatpush1.xpose.msra.mxu0 %v1940
        %2017 = vmatprep.subr.mxu0 0.0
        %2018 = vmatpush1.xpose.msra.mxu0 %v1941
        %2019 = vmatprep.subr.mxu0 0.0
        %2020 = vmatpush1.xpose.msra.mxu0 %v1942
        %2021 = vmatprep.subr.mxu0 0.0
        %2022 = vmatpush1.xpose.msra.mxu0 %v1943
        %2023 = vmatprep.subr.mxu0 0.0
        %2024 = vmatpush1.xpose.msra.mxu0 %v1944
        %2025 = vmatprep.subr.mxu0 0.0
        %2026 = vmatpush1.xpose.msra.mxu0 %v1945
        %2027 = vmatprep.subr.mxu0 0.0
        %2028 = vmatpush1.xpose.msra.mxu0 %v1946
        %2029 = vmatprep.subr.mxu0 0.0
        %2030 = vmatpush1.xpose.msra.mxu0 %v1947
        %2031 = vmatprep.subr.mxu0 0.0
        %2032 = vmatpush1.xpose.msra.mxu0 %v1948
        %2033 = vmatprep.subr.mxu0 0.0
        %2034 = vmatpush1.xpose.msra.mxu0 %v1949
        %2035 = vmatprep.subr.mxu0 0.0
        %2036 = vmatpush1.xpose.msra.mxu0 %v1950
        %2037 = vmatprep.subr.mxu0 0.0
        %2038 = vmatpush1.xpose.msra.mxu0 %v1951
        %2039 = vmatprep.subr.mxu0 0.0
        %2040 = vmatpush1.xpose.msra.mxu0 %v1952
        %2041 = vmatprep.subr.mxu0 0.0
        %2042 = vmatpush1.xpose.msra.mxu0 %v1953
        %2043 = vmatprep.subr.mxu0 0.0
        %2044 = vmatpush1.xpose.msra.mxu0 %v1954
        %2045 = vmatprep.subr.mxu0 0.0
        %2046 = vmatpush1.xpose.msra.mxu0 %v1955
        %2047 = vmatprep.subr.mxu0 0.0
        %2048 = vmatpush1.xpose.msra.mxu0 %v1956
        %2049 = vmatprep.subr.mxu0 0.0
        %2050 = vmatpush1.xpose.msra.mxu0 %v1957
        %2051 = vmatprep.subr.mxu0 0.0
        %2052 = vmatpush1.xpose.msra.mxu0 %v1958
        %2053 = vmatprep.subr.mxu0 0.0
        %2054 = vmatpush1.xpose.msra.mxu0 %v1959
        %2055 = vmatprep.subr.mxu0 0.0
        %2056 = vmatpush1.xpose.msra.mxu0 %v1960
        %2057 = vmatprep.subr.mxu0 0.0
        %2058 = vmatpush1.xpose.msra.mxu0 %v1961
        %2059 = vmatprep.subr.mxu0 0.0
        %2060 = vmatpush1.xpose.msra.mxu0 %v1962
        %2061 = vmatprep.subr.mxu0 0.0
        %2062 = vmatpush1.xpose.msra.mxu0 %v1963
        %2063 = vmatprep.subr.mxu0 0.0
        %2064 = vmatpush1.xpose.msra.mxu0 %v1964
        %2065 = vmatprep.subr.mxu0 0.0
        %2066 = vmatpush1.xpose.msra.mxu0 %v1965
        %2067 = vmatprep.subr.mxu0 0.0
        %2068 = vmatpush1.xpose.msra.mxu0 %v1966
        %2069 = vmatprep.subr.mxu0 0.0
        %2070 = vmatpush1.xpose.msra.mxu0 %v1967
        %2071 = vmatprep.subr.mxu0 0.0
        %2072 = vmatpush1.xpose.msra.mxu0 %v1968
        %2073 = vmatprep.subr.mxu0 0.0
        %2074 = vmatpush1.xpose.msra.mxu0 %v1969
        %2075 = vmatprep.subr.mxu0 0.0
        %2076 = vmatpush1.xpose.msra.mxu0 %v1970
        %2077 = vmatprep.subr.mxu0 0.0
        %2078 = vmatpush1.xpose.msra.mxu0 %v1971
        %2079 = vmatprep.mubr.f32.mxu0 0.0
        %2080 = vmatmul.mubr.f32.gmra.mrb[0].mxu0 %v2004
        %v2081 = vpop.f32.mrb[0].mxu0
        %v2082 = vadd.f32 %v2014, %v2081
        %v2083 = vpop.f32.mrb[0].mxu0
        %v2084 = vadd.f32 %v2014, %v2083
        %2085 = vdwg.mxu0
        %2086 = vmatprep.subr.mxu0 0.0
        %2087 = vmatpush1.xpose.msra.mxu0 %v1972
        %2088 = vmatprep.subr.mxu0 0.0
        %2089 = vmatpush1.xpose.msra.mxu0 %v1973
        %2090 = vmatprep.subr.mxu0 0.0
        %2091 = vmatpush1.xpose.msra.mxu0 %v1974
        %2092 = vmatprep.subr.mxu0 0.0
        %2093 = vmatpush1.xpose.msra.mxu0 %v1975
        %2094 = vmatprep.subr.mxu0 0.0
        %2095 = vmatpush1.xpose.msra.mxu0 %v1976
        %2096 = vmatprep.subr.mxu0 0.0
        %2097 = vmatpush1.xpose.msra.mxu0 %v1977
        %2098 = vmatprep.subr.mxu0 0.0
        %2099 = vmatpush1.xpose.msra.mxu0 %v1978
        %2100 = vmatprep.subr.mxu0 0.0
        %2101 = vmatpush1.xpose.msra.mxu0 %v1979
        %2102 = vmatprep.subr.mxu0 0.0
        %2103 = vmatpush1.xpose.msra.mxu0 %v1980
        %2104 = vmatprep.subr.mxu0 0.0
        %2105 = vmatpush1.xpose.msra.mxu0 %v1981
        %2106 = vmatprep.subr.mxu0 0.0
        %2107 = vmatpush1.xpose.msra.mxu0 %v1982
        %2108 = vmatprep.subr.mxu0 0.0
        %2109 = vmatpush1.xpose.msra.mxu0 %v1983
        %2110 = vmatprep.subr.mxu0 0.0
        %2111 = vmatpush1.xpose.msra.mxu0 %v1984
        %2112 = vmatprep.subr.mxu0 0.0
        %2113 = vmatpush1.xpose.msra.mxu0 %v1985
        %2114 = vmatprep.subr.mxu0 0.0
        %2115 = vmatpush1.xpose.msra.mxu0 %v1986
        %2116 = vmatprep.subr.mxu0 0.0
        %2117 = vmatpush1.xpose.msra.mxu0 %v1987
        %2118 = vmatprep.subr.mxu0 0.0
        %2119 = vmatpush1.xpose.msra.mxu0 %v1988
        %2120 = vmatprep.subr.mxu0 0.0
        %2121 = vmatpush1.xpose.msra.mxu0 %v1989
        %2122 = vmatprep.subr.mxu0 0.0
        %2123 = vmatpush1.xpose.msra.mxu0 %v1990
        %2124 = vmatprep.subr.mxu0 0.0
        %2125 = vmatpush1.xpose.msra.mxu0 %v1991
        %2126 = vmatprep.subr.mxu0 0.0
        %2127 = vmatpush1.xpose.msra.mxu0 %v1992
        %2128 = vmatprep.subr.mxu0 0.0
        %2129 = vmatpush1.xpose.msra.mxu0 %v1993
        %2130 = vmatprep.subr.mxu0 0.0
        %2131 = vmatpush1.xpose.msra.mxu0 %v1994
        %2132 = vmatprep.subr.mxu0 0.0
        %2133 = vmatpush1.xpose.msra.mxu0 %v1995
        %2134 = vmatprep.subr.mxu0 0.0
        %2135 = vmatpush1.xpose.msra.mxu0 %v1996
        %2136 = vmatprep.subr.mxu0 0.0
        %2137 = vmatpush1.xpose.msra.mxu0 %v1997
        %2138 = vmatprep.subr.mxu0 0.0
        %2139 = vmatpush1.xpose.msra.mxu0 %v1998
        %2140 = vmatprep.subr.mxu0 0.0
        %2141 = vmatpush1.xpose.msra.mxu0 %v1999
        %2142 = vmatprep.subr.mxu0 0.0
        %2143 = vmatpush1.xpose.msra.mxu0 %v2000
        %2144 = vmatprep.subr.mxu0 0.0
        %2145 = vmatpush1.xpose.msra.mxu0 %v2001
        %2146 = vmatprep.subr.mxu0 0.0
        %2147 = vmatpush1.xpose.msra.mxu0 %v2002
        %2148 = vmatprep.subr.mxu0 0.0
        %2149 = vmatpush1.xpose.msra.mxu0 %v2003
        %2150 = vmatprep.mubr.f32.mxu0 0.0
        %2151 = vmatmul.mubr.f32.gmra.mrb[0].mxu0 %v2004
        %v2152 = vpop.f32.mrb[0].mxu0
        %v2153 = vadd.f32 %v2014, %v2152
        %v2154 = vpop.f32.mrb[0].mxu0
        %v2155 = vadd.f32 %v2014, %v2154
        %2156 = vdwg.mxu0
        %v2161 = vcombine.low %v2082, %v2084
        %v2162 = vcombine.low %v2153, %v2155
        %v2164 = vunpack.c.l.s4 1966171168
        %v2165 = vunpack.c.0.s8 %v2164
        %v2166 = vlaneseq
        %v2167 = vshrl.u32 %v2166, 7
        %v2168 = vsub.s32 %v2165, %v2167
        %v2169 = vrot.slane %v2161, %v2168
        %v2171 = vunpack.c.l.s4 1966171168
        %v2172 = vunpack.c.0.s8 %v2171
        %v2173 = vlaneseq
        %v2174 = vshrl.u32 %v2173, 7
        %v2175 = vsub.s32 %v2172, %v2174
        %v2176 = vrot.slane %v2162, %v2175
        %v2177 = vcombine.low %v2169, %v2176
        %v2179 = vunpack.c.l.s4 1966171168
        %v2180 = vunpack.c.0.s8 %v2179
        %v2181 = vlaneseq
        %v2182 = vshrl.u32 %v2181, 7
        %v2183 = vsub.s32 %v2180, %v2182
        %v2184 = vrot.slane %v2177, %v2183
        %v2186 = vlaneseq
        %vm2187 = vcmp.ge.s32.totalorder %v2186, 0
        %vm2188 = vcmp.lt.s32.totalorder %v2186, 512
        %vm2189 = vmand %vm2187, %vm2188
        %2190 = vst.msk [vmem:[%s311] sm:$0xf] %vm2189, %v2184
        %s2191 = smul.u32 %s29, 512
        %v2192 = vlaneseq
        %v2193 = vand.u32 %v2192, 127
        %v2194 = vadd.s32 %v2193, 128
        %v2195 = vadd.s32 %v2193, 256
        %v2196 = vadd.s32 %v2193, 384
        %v2197 = vstv %s2191
        %v2198 = vadd.s32 %v2197, %v2193
        %v2199 = vadd.s32 %v2197, %v2194
        %v2200 = vadd.s32 %v2197, %v2195
        %v2201 = vadd.s32 %v2197, %v2196
        %vm2202 = vcmp.lt.s32.totalorder %v2198, 600
        %vm2203 = vcmp.lt.s32.totalorder %v2199, 600
        %vm2204 = vcmp.lt.s32.totalorder %v2200, 600
        %vm2205 = vcmp.lt.s32.totalorder %v2201, 600
        %v2206 = vsel %vm2202, %v2082, -inf
        %v2207 = vsel %vm2203, %v2084, -inf
        %v2208 = vsel %vm2204, %v2153, -inf
        %v2209 = vsel %vm2205, %v2155, -inf
        %v2210 = vld [vmem:[#allocation2] sm:$0x1]
        %vm2211 = vcmask 1040384
        %v2212 = vsel %vm2211, %v2206, -inf
        %v2213 = vsel %vm2211, %v2207, -inf
        %v2214 = vsel %vm2211, %v2208, -inf
        %v2215 = vsel %vm2211, %v2209, -inf
        %v2216 = vmax.f32 %v2212, %v2213
        %v2217 = vmax.f32 %v2214, %v2215
        %v2218 = vmax.f32 %v2216, %v2217
        %2219 = vmax.xlane.f32.xlu0 %v2218
        %v2220 = vpop.xlane.xlu0 %2219
        %v2221 = vmax.f32 %v2210, %v2220
        %v2222 = vsub.f32 %v2210, %v2221
        %v2223 = vmul.f32 %v2222, 1.442695
        %v2224 = vpow.pop %v2223
        %2226 = vset.pattern.permute.xlu0 0
        %2227 = vperm.xlu0 %2226, %v2221
        %v2228 = vpop.permute.xlu0 %2227
        %v2230 = vlaneseq
        %v2231 = vshrl.u32 %v2230, 7
        %v2232 = vsub.s32 0, %v2231
        %v2233 = vrot.slane %v2228, %v2232
        %v2234 = vsub.f32 %v2206, %v2233
        %v2235 = vsub.f32 %v2207, %v2233
        %v2236 = vsub.f32 %v2208, %v2233
        %v2237 = vsub.f32 %v2209, %v2233
        %v2238 = vmul.f32 %v2234, 1.442695
        %v2239 = vpow.pop %v2238
        %v2240 = vmul.f32 %v2235, 1.442695
        %v2241 = vpow.pop %v2240
        %v2242 = vmul.f32 %v2236, 1.442695
        %v2243 = vpow.pop %v2242
        %v2244 = vmul.f32 %v2237, 1.442695
        %v2245 = vpow.pop %v2244
        %v2246 = vld [vmem:[#allocation3] sm:$0x1]
        %v2247 = vmul.f32 %v2224, %v2246
        %v2248 = vsel %vm2211, %v2239, 0.0
        %v2249 = vsel %vm2211, %v2241, 0.0
        %v2250 = vadd.f32 %v2248, %v2249
        %v2251 = vsel %vm2211, %v2243, 0.0
        %v2252 = vadd.f32 %v2250, %v2251
        %v2253 = vsel %vm2211, %v2245, 0.0
        %v2254 = vadd.f32 %v2252, %v2253
        %2255 = vadd.xlane.f32.xlu0 %v2254
        %v2256 = vpop.xlane.xlu0 %2255
        %v2257 = vadd.f32 %v2247, %v2256
        %vm2258 = vcmask 0
        %2259 = vst.msk [vmem:[#allocation3] sm:$0x1] %vm2258, %v2257
        %2260 = vst.msk [vmem:[#allocation2] sm:$0x1] %vm2258, %v2221
        %v2261 = vld [vmem:[#allocation13] sm:$0xf]
        %2263 = vset.pattern.permute.xlu0 0
        %2264 = vperm.xlu0 %2263, %v2224
        %v2265 = vpop.permute.xlu0 %2264
        %v2267 = vlaneseq
        %v2268 = vshrl.u32 %v2267, 7
        %v2269 = vsub.s32 0, %v2268
        %v2270 = vrot.slane %v2265, %v2269
        %v2271 = vmul.f32 %v2261, %v2270
        %2272 = vmatprep.subr.mxu0 %v327
        %2273 = vmatpush1.msra.mxu0 %v326
        %2274 = vmatprep.subr.mxu0 %v331
        %2275 = vmatpush1.msra.mxu0 %v330
        %2276 = vmatprep.subr.mxu0 %v335
        %2277 = vmatpush1.msra.mxu0 %v334
        %2278 = vmatprep.subr.mxu0 %v339
        %2279 = vmatpush1.msra.mxu0 %v338
        %2280 = vmatprep.subr.mxu0 %v343
        %2281 = vmatpush1.msra.mxu0 %v342
        %2282 = vmatprep.subr.mxu0 %v347
        %2283 = vmatpush1.msra.mxu0 %v346
        %2284 = vmatprep.subr.mxu0 %v351
        %2285 = vmatpush1.msra.mxu0 %v350
        %2286 = vmatprep.subr.mxu0 %v355
        %2287 = vmatpush1.msra.mxu0 %v354
        %2288 = vmatprep.subr.mxu0 %v359
        %2289 = vmatpush1.msra.mxu0 %v358
        %2290 = vmatprep.subr.mxu0 %v363
        %2291 = vmatpush1.msra.mxu0 %v362
        %2292 = vmatprep.subr.mxu0 %v367
        %2293 = vmatpush1.msra.mxu0 %v366
        %2294 = vmatprep.subr.mxu0 %v371
        %2295 = vmatpush1.msra.mxu0 %v370
        %2296 = vmatprep.subr.mxu0 %v375
        %2297 = vmatpush1.msra.mxu0 %v374
        %2298 = vmatprep.subr.mxu0 %v379
        %2299 = vmatpush1.msra.mxu0 %v378
        %2300 = vmatprep.subr.mxu0 %v383
        %2301 = vmatpush1.msra.mxu0 %v382
        %2302 = vmatprep.subr.mxu0 %v387
        %2303 = vmatpush1.msra.mxu0 %v386
        %2304 = vmatprep.subr.mxu0 %v391
        %2305 = vmatpush1.msra.mxu0 %v390
        %2306 = vmatprep.subr.mxu0 %v395
        %2307 = vmatpush1.msra.mxu0 %v394
        %2308 = vmatprep.subr.mxu0 %v399
        %2309 = vmatpush1.msra.mxu0 %v398
        %2310 = vmatprep.subr.mxu0 %v403
        %2311 = vmatpush1.msra.mxu0 %v402
        %2312 = vmatprep.subr.mxu0 %v407
        %2313 = vmatpush1.msra.mxu0 %v406
        %2314 = vmatprep.subr.mxu0 %v411
        %2315 = vmatpush1.msra.mxu0 %v410
        %2316 = vmatprep.subr.mxu0 %v415
        %2317 = vmatpush1.msra.mxu0 %v414
        %2318 = vmatprep.subr.mxu0 %v419
        %2319 = vmatpush1.msra.mxu0 %v418
        %2320 = vmatprep.subr.mxu0 %v423
        %2321 = vmatpush1.msra.mxu0 %v422
        %2322 = vmatprep.subr.mxu0 %v427
        %2323 = vmatpush1.msra.mxu0 %v426
        %2324 = vmatprep.subr.mxu0 %v431
        %2325 = vmatpush1.msra.mxu0 %v430
        %2326 = vmatprep.subr.mxu0 %v435
        %2327 = vmatpush1.msra.mxu0 %v434
        %2328 = vmatprep.subr.mxu0 %v439
        %2329 = vmatpush1.msra.mxu0 %v438
        %2330 = vmatprep.subr.mxu0 %v443
        %2331 = vmatpush1.msra.mxu0 %v442
        %2332 = vmatprep.subr.mxu0 %v447
        %2333 = vmatpush1.msra.mxu0 %v446
        %2334 = vmatprep.subr.mxu0 %v451
        %2335 = vmatpush1.msra.mxu0 %v450
        %2336 = vmatprep.mubr.f32.mxu0 %v2241
        %2337 = vmatmul.mubr.f32.gmra.mrb[0].mxu0 %v2239
        %v2338 = vpop.f32.mrb[0].mxu0
        %v2339 = vadd.f32 0.0, %v2338
        %v2340 = vpop.f32.mrb[0].mxu0
        %v2341 = vadd.f32 0.0, %v2340
        %2342 = vdwg.mxu0
        %2343 = vmatprep.subr.mxu0 %v455
        %2344 = vmatpush1.msra.mxu0 %v454
        %2345 = vmatprep.subr.mxu0 %v459
        %2346 = vmatpush1.msra.mxu0 %v458
        %2347 = vmatprep.subr.mxu0 %v463
        %2348 = vmatpush1.msra.mxu0 %v462
        %2349 = vmatprep.subr.mxu0 %v467
        %2350 = vmatpush1.msra.mxu0 %v466
        %2351 = vmatprep.subr.mxu0 %v471
        %2352 = vmatpush1.msra.mxu0 %v470
        %2353 = vmatprep.subr.mxu0 %v475
        %2354 = vmatpush1.msra.mxu0 %v474
        %2355 = vmatprep.subr.mxu0 %v479
        %2356 = vmatpush1.msra.mxu0 %v478
        %2357 = vmatprep.subr.mxu0 %v483
        %2358 = vmatpush1.msra.mxu0 %v482
        %2359 = vmatprep.subr.mxu0 %v487
        %2360 = vmatpush1.msra.mxu0 %v486
        %2361 = vmatprep.subr.mxu0 %v491
        %2362 = vmatpush1.msra.mxu0 %v490
        %2363 = vmatprep.subr.mxu0 %v495
        %2364 = vmatpush1.msra.mxu0 %v494
        %2365 = vmatprep.subr.mxu0 %v499
        %2366 = vmatpush1.msra.mxu0 %v498
        %2367 = vmatprep.subr.mxu0 %v503
        %2368 = vmatpush1.msra.mxu0 %v502
        %2369 = vmatprep.subr.mxu0 %v507
        %2370 = vmatpush1.msra.mxu0 %v506
        %2371 = vmatprep.subr.mxu0 %v511
        %2372 = vmatpush1.msra.mxu0 %v510
        %2373 = vmatprep.subr.mxu0 %v515
        %2374 = vmatpush1.msra.mxu0 %v514
        %2375 = vmatprep.subr.mxu0 %v519
        %2376 = vmatpush1.msra.mxu0 %v518
        %2377 = vmatprep.subr.mxu0 %v523
        %2378 = vmatpush1.msra.mxu0 %v522
        %2379 = vmatprep.subr.mxu0 %v527
        %2380 = vmatpush1.msra.mxu0 %v526
        %2381 = vmatprep.subr.mxu0 %v531
        %2382 = vmatpush1.msra.mxu0 %v530
        %2383 = vmatprep.subr.mxu0 %v535
        %2384 = vmatpush1.msra.mxu0 %v534
        %2385 = vmatprep.subr.mxu0 %v539
        %2386 = vmatpush1.msra.mxu0 %v538
        %2387 = vmatprep.subr.mxu0 %v543
        %2388 = vmatpush1.msra.mxu0 %v542
        %2389 = vmatprep.subr.mxu0 %v547
        %2390 = vmatpush1.msra.mxu0 %v546
        %2391 = vmatprep.subr.mxu0 %v551
        %2392 = vmatpush1.msra.mxu0 %v550
        %2393 = vmatprep.subr.mxu0 %v555
        %2394 = vmatpush1.msra.mxu0 %v554
        %2395 = vmatprep.subr.mxu0 %v559
        %2396 = vmatpush1.msra.mxu0 %v558
        %2397 = vmatprep.subr.mxu0 %v563
        %2398 = vmatpush1.msra.mxu0 %v562
        %2399 = vmatprep.subr.mxu0 %v567
        %2400 = vmatpush1.msra.mxu0 %v566
        %2401 = vmatprep.subr.mxu0 %v571
        %2402 = vmatpush1.msra.mxu0 %v570
        %2403 = vmatprep.subr.mxu0 %v575
        %2404 = vmatpush1.msra.mxu0 %v574
        %2405 = vmatprep.subr.mxu0 %v579
        %2406 = vmatpush1.msra.mxu0 %v578
        %2407 = vmatprep.mubr.f32.mxu0 %v2245
        %2408 = vmatmul.mubr.f32.gmra.mrb[0].mxu0 %v2243
        %v2409 = vpop.f32.mrb[0].mxu0
        %v2410 = vadd.f32 %v2339, %v2409
        %v2411 = vpop.f32.mrb[0].mxu0
        %v2412 = vadd.f32 %v2341, %v2411
        %2413 = vdwg.mxu0
        %2414 = vmatprep.subr.mxu0 %v329
        %2415 = vmatpush1.msra.mxu0 %v328
        %2416 = vmatprep.subr.mxu0 %v333
        %2417 = vmatpush1.msra.mxu0 %v332
        %2418 = vmatprep.subr.mxu0 %v337
        %2419 = vmatpush1.msra.mxu0 %v336
        %2420 = vmatprep.subr.mxu0 %v341
        %2421 = vmatpush1.msra.mxu0 %v340
        %2422 = vmatprep.subr.mxu0 %v345
        %2423 = vmatpush1.msra.mxu0 %v344
        %2424 = vmatprep.subr.mxu0 %v349
        %2425 = vmatpush1.msra.mxu0 %v348
        %2426 = vmatprep.subr.mxu0 %v353
        %2427 = vmatpush1.msra.mxu0 %v352
        %2428 = vmatprep.subr.mxu0 %v357
        %2429 = vmatpush1.msra.mxu0 %v356
        %2430 = vmatprep.subr.mxu0 %v361
        %2431 = vmatpush1.msra.mxu0 %v360
        %2432 = vmatprep.subr.mxu0 %v365
        %2433 = vmatpush1.msra.mxu0 %v364
        %2434 = vmatprep.subr.mxu0 %v369
        %2435 = vmatpush1.msra.mxu0 %v368
        %2436 = vmatprep.subr.mxu0 %v373
        %2437 = vmatpush1.msra.mxu0 %v372
        %2438 = vmatprep.subr.mxu0 %v377
        %2439 = vmatpush1.msra.mxu0 %v376
        %2440 = vmatprep.subr.mxu0 %v381
        %2441 = vmatpush1.msra.mxu0 %v380
        %2442 = vmatprep.subr.mxu0 %v385
        %2443 = vmatpush1.msra.mxu0 %v384
        %2444 = vmatprep.subr.mxu0 %v389
        %2445 = vmatpush1.msra.mxu0 %v388
        %2446 = vmatprep.subr.mxu0 %v393
        %2447 = vmatpush1.msra.mxu0 %v392
        %2448 = vmatprep.subr.mxu0 %v397
        %2449 = vmatpush1.msra.mxu0 %v396
        %2450 = vmatprep.subr.mxu0 %v401
        %2451 = vmatpush1.msra.mxu0 %v400
        %2452 = vmatprep.subr.mxu0 %v405
        %2453 = vmatpush1.msra.mxu0 %v404
        %2454 = vmatprep.subr.mxu0 %v409
        %2455 = vmatpush1.msra.mxu0 %v408
        %2456 = vmatprep.subr.mxu0 %v413
        %2457 = vmatpush1.msra.mxu0 %v412
        %2458 = vmatprep.subr.mxu0 %v417
        %2459 = vmatpush1.msra.mxu0 %v416
        %2460 = vmatprep.subr.mxu0 %v421
        %2461 = vmatpush1.msra.mxu0 %v420
        %2462 = vmatprep.subr.mxu0 %v425
        %2463 = vmatpush1.msra.mxu0 %v424
        %2464 = vmatprep.subr.mxu0 %v429
        %2465 = vmatpush1.msra.mxu0 %v428
        %2466 = vmatprep.subr.mxu0 %v433
        %2467 = vmatpush1.msra.mxu0 %v432
        %2468 = vmatprep.subr.mxu0 %v437
        %2469 = vmatpush1.msra.mxu0 %v436
        %2470 = vmatprep.subr.mxu0 %v441
        %2471 = vmatpush1.msra.mxu0 %v440
        %2472 = vmatprep.subr.mxu0 %v445
        %2473 = vmatpush1.msra.mxu0 %v444
        %2474 = vmatprep.subr.mxu0 %v449
        %2475 = vmatpush1.msra.mxu0 %v448
        %2476 = vmatprep.subr.mxu0 %v453
        %2477 = vmatpush1.msra.mxu0 %v452
        %2478 = vmatprep.mubr.f32.mxu0 %v2241
        %2479 = vmatmul.mubr.f32.gmra.mrb[0].mxu0 %v2239
        %v2480 = vpop.f32.mrb[0].mxu0
        %v2481 = vadd.f32 0.0, %v2480
        %v2482 = vpop.f32.mrb[0].mxu0
        %v2483 = vadd.f32 0.0, %v2482
        %2484 = vdwg.mxu0
        %2485 = vmatprep.subr.mxu0 %v457
        %2486 = vmatpush1.msra.mxu0 %v456
        %2487 = vmatprep.subr.mxu0 %v461
        %2488 = vmatpush1.msra.mxu0 %v460
        %2489 = vmatprep.subr.mxu0 %v465
        %2490 = vmatpush1.msra.mxu0 %v464
        %2491 = vmatprep.subr.mxu0 %v469
        %2492 = vmatpush1.msra.mxu0 %v468
        %2493 = vmatprep.subr.mxu0 %v473
        %2494 = vmatpush1.msra.mxu0 %v472
        %2495 = vmatprep.subr.mxu0 %v477
        %2496 = vmatpush1.msra.mxu0 %v476
        %2497 = vmatprep.subr.mxu0 %v481
        %2498 = vmatpush1.msra.mxu0 %v480
        %2499 = vmatprep.subr.mxu0 %v485
        %2500 = vmatpush1.msra.mxu0 %v484
        %2501 = vmatprep.subr.mxu0 %v489
        %2502 = vmatpush1.msra.mxu0 %v488
        %2503 = vmatprep.subr.mxu0 %v493
        %2504 = vmatpush1.msra.mxu0 %v492
        %2505 = vmatprep.subr.mxu0 %v497
        %2506 = vmatpush1.msra.mxu0 %v496
        %2507 = vmatprep.subr.mxu0 %v501
        %2508 = vmatpush1.msra.mxu0 %v500
        %2509 = vmatprep.subr.mxu0 %v505
        %2510 = vmatpush1.msra.mxu0 %v504
        %2511 = vmatprep.subr.mxu0 %v509
        %2512 = vmatpush1.msra.mxu0 %v508
        %2513 = vmatprep.subr.mxu0 %v513
        %2514 = vmatpush1.msra.mxu0 %v512
        %2515 = vmatprep.subr.mxu0 %v517
        %2516 = vmatpush1.msra.mxu0 %v516
        %2517 = vmatprep.subr.mxu0 %v521
        %2518 = vmatpush1.msra.mxu0 %v520
        %2519 = vmatprep.subr.mxu0 %v525
        %2520 = vmatpush1.msra.mxu0 %v524
        %2521 = vmatprep.subr.mxu0 %v529
        %2522 = vmatpush1.msra.mxu0 %v528
        %2523 = vmatprep.subr.mxu0 %v533
        %2524 = vmatpush1.msra.mxu0 %v532
        %2525 = vmatprep.subr.mxu0 %v537
        %2526 = vmatpush1.msra.mxu0 %v536
        %2527 = vmatprep.subr.mxu0 %v541
        %2528 = vmatpush1.msra.mxu0 %v540
        %2529 = vmatprep.subr.mxu0 %v545
        %2530 = vmatpush1.msra.mxu0 %v544
        %2531 = vmatprep.subr.mxu0 %v549
        %2532 = vmatpush1.msra.mxu0 %v548
        %2533 = vmatprep.subr.mxu0 %v553
        %2534 = vmatpush1.msra.mxu0 %v552
        %2535 = vmatprep.subr.mxu0 %v557
        %2536 = vmatpush1.msra.mxu0 %v556
        %2537 = vmatprep.subr.mxu0 %v561
        %2538 = vmatpush1.msra.mxu0 %v560
        %2539 = vmatprep.subr.mxu0 %v565
        %2540 = vmatpush1.msra.mxu0 %v564
        %2541 = vmatprep.subr.mxu0 %v569
        %2542 = vmatpush1.msra.mxu0 %v568
        %2543 = vmatprep.subr.mxu0 %v573
        %2544 = vmatpush1.msra.mxu0 %v572
        %2545 = vmatprep.subr.mxu0 %v577
        %2546 = vmatpush1.msra.mxu0 %v576
        %2547 = vmatprep.subr.mxu0 %v581
        %2548 = vmatpush1.msra.mxu0 %v580
        %2549 = vmatprep.mubr.f32.mxu0 %v2245
        %2550 = vmatmul.mubr.f32.gmra.mrb[0].mxu0 %v2243
        %v2551 = vpop.f32.mrb[0].mxu0
        %v2552 = vadd.f32 %v2481, %v2551
        %v2553 = vpop.f32.mrb[0].mxu0
        %v2554 = vadd.f32 %v2483, %v2553
        %2555 = vdwg.mxu0
        %v2560 = vcombine.low %v2410, %v2412
        %v2561 = vcombine.low %v2552, %v2554
        %v2563 = vunpack.c.l.s4 1966171168
        %v2564 = vunpack.c.0.s8 %v2563
        %v2565 = vlaneseq
        %v2566 = vshrl.u32 %v2565, 7
        %v2567 = vsub.s32 %v2564, %v2566
        %v2568 = vrot.slane %v2560, %v2567
        %v2570 = vunpack.c.l.s4 1966171168
        %v2571 = vunpack.c.0.s8 %v2570
        %v2572 = vlaneseq
        %v2573 = vshrl.u32 %v2572, 7
        %v2574 = vsub.s32 %v2571, %v2573
        %v2575 = vrot.slane %v2561, %v2574
        %v2576 = vcombine.low %v2568, %v2575
        %v2578 = vunpack.c.l.s4 1966171168
        %v2579 = vunpack.c.0.s8 %v2578
        %v2580 = vlaneseq
        %v2581 = vshrl.u32 %v2580, 7
        %v2582 = vsub.s32 %v2579, %v2581
        %v2583 = vrot.slane %v2576, %v2582
        %v2585 = vadd.f32 %v2271, %v2583
        %2586 = vst.msk [vmem:[#allocation13] sm:$0xf] %vm2189, %v2585
        %p2587 = scmp.eq.s32.totalorder %s29, 1
        // Predicated region
        $region61: #{tpu_custom_call.1} parent=39 // pred_check
          %p2588 = pneg %p2587
        $region62: #{tpu_custom_call.1} parent=39 // pred_check_branch
          %2590 = sbr.rel (%p2588) target = $region64
        $region63: #{tpu_custom_call.1} parent=39 // pred_region
          %v2591 = vld [vmem:[#allocation13] sm:$0xf]
          %v2592 = vld [vmem:[#allocation3] sm:$0x1]
          %v2593 = vrcp.pop %v2592
          %2595 = vset.pattern.permute.xlu0 0
          %2596 = vperm.xlu0 %2595, %v2593
          %v2597 = vpop.permute.xlu0 %2596
          %v2599 = vlaneseq
          %v2600 = vshrl.u32 %v2599, 7
          %v2601 = vsub.s32 0, %v2600
          %v2602 = vrot.slane %v2597, %v2601
          %v2603 = vmul.f32 %v2591, %v2602
          %2604 = vst.msk [vmem:[#allocation13] sm:$0xf] %vm2189, %v2603
        $region64: #{tpu_custom_call.1} parent=39 // pred_fallthru
          _
        %s2605 = sand.u32 %s168, 1
        %s2606 = scalar_lea.sflag [#allocation15], %s2605
        %s2607 = sand.u32 %s168, 1
        %s2608 = smul.addr %s2607, 4
        %s2609 = scalar_lea.vmem [#allocation14], %s2608
        // Predicated region
        $region65: #{tpu_custom_call.1} parent=39 // pred_check
          %p2610 = pneg %p152
        $region66: #{tpu_custom_call.1} parent=39 // pred_check_branch
          %2612 = sbr.rel (%p2610) target = $region68
        $region67: #{tpu_custom_call.1} parent=39 // pred_region
          %s2614 = ssub.s32 64, 64
          %2615 = vsyncadd [#allocation7], %s2614
          %s2617 = sshll.u32 [#allocation13], 4
          %s2618 = int_to_ptr.vmem [resolvable:$true] %s2617
          %2620 = dma.vmem_to_hbm [thread:$0]  %s2618, 64, %s5, [#allocation7]
        $region68: #{tpu_custom_call.1} parent=39 // pred_fallthru
          _
        // Predicated region
        $region69: #{tpu_custom_call.1} parent=39 // pred_check
          %p2621 = pneg %p178
        $region70: #{tpu_custom_call.1} parent=39 // pred_check_branch
          %2623 = sbr.rel (%p2621) target = $region72
        $region71: #{tpu_custom_call.1} parent=39 // pred_region
          %s2624 = smul.u32 4, %s29
          %s2626 = ssub.s32 64, 64
          %2627 = vsyncadd %s2606, %s2626
          %s2628 = smul.addr %s2624, 16
          %s2629 = scalar_lea.hbm %s6, %s2628
          %s2631 = sshll.u32 %s2609, 4
          %s2632 = int_to_ptr.vmem [resolvable:$true] %s2631
          %2634 = dma.vmem_to_hbm [thread:$0]  %s2632, 64, %s2629, %s2606
        $region72: #{tpu_custom_call.1} parent=39 // pred_fallthru
          _
        // Predicated region
        $region73: #{tpu_custom_call.1} parent=39 // pred_check
          %p2635 = pneg %p152
        $region74: #{tpu_custom_call.1} parent=39 // pred_check_branch
          %2637 = sbr.rel (%p2635) target = $region76
        $region75: #{tpu_custom_call.1} parent=39 // pred_region
          %2638 = dma.done [#allocation7], 64
        $region76: #{tpu_custom_call.1} parent=39 // pred_fallthru
          _
      $region40: #{tpu_custom_call.1} parent=5 // pred_fallthru
        _
      %p2639 = scmp.le.s32.totalorder 2, %s24
      // Predicated region
      $region77: #{tpu_custom_call.1} parent=5 // pred_check
        %p2640 = pneg %p2639
      $region78: #{tpu_custom_call.1} parent=5 // pred_check_branch
        %2642 = sbr.rel (%p2640) target = $region80
      $region79: #{tpu_custom_call.1} parent=5 // pred_region
        %s2643 = ssub.s32 %s24, 2
        // Predicated region
        $region81: #{tpu_custom_call.1} parent=79 // pred_check
          %p2644 = pneg %p184
        $region82: #{tpu_custom_call.1} parent=79 // pred_check_branch
          %2646 = sbr.rel (%p2644) target = $region84
        $region83: #{tpu_custom_call.1} parent=79 // pred_region
          %s2647 = sand.u32 %s169, 1
          %s2648 = scalar_lea.sflag [#allocation15], %s2647
          %s2649 = sand.u32 %s169, 1
          %s2650 = smul.addr %s2649, 4
          %s2651 = scalar_lea.vmem [#allocation14], %s2650
          %2652 = dma.done %s2648, 64
        $region84: #{tpu_custom_call.1} parent=79 // pred_fallthru
          _
      $region80: #{tpu_custom_call.1} parent=5 // pred_fallthru
        _
    $region6: #{tpu_custom_call.1} parent=1 // loop_footer
      %s28 = sadd.s32 1, %s24
    $region7: #{tpu_custom_call.1} parent=1 // loop_footer_branch
      %23 = sbr.rel target = $region3
    $region8: #{tpu_custom_call.1} parent=1 // loop_exit
      _
    %2653 = vsyncpa [#allocation6], 1
    %s2654 = scalar_lea.sflag [#allocation6], 1
    %2655 = vsyncpa %s2654, 1
    %2656 = vsyncpa [#allocation9], 1
    %2657 = vsyncpa [#allocation12], 1
    %2658 = vsyncpa [#allocation7], 1
    %s2659 = scalar_lea.sflag [#allocation7], 1
    %2660 = vsyncpa %s2659, 1
    %2661 = vsyncpa [#allocation15], 1
    %s2662 = scalar_lea.sflag [#allocation15], 1
    %2663 = vsyncpa %s2662, 1

</llo_original>
